<compile_context>
chip_gen: v5e
topology: v5e:2x2
jax: 0.10.0
libtpu: 0.0.40
codegen_flags: <defaults>
</compile_context>

<pallas_src>
import math

import numpy as np
import jax
import jax.numpy as jnp
from jax.experimental import pallas as pl
from jax.experimental.pallas import tpu as pltpu

_FEATURE_SIZES = (13, 32, 7, 24, 4)   # month, day, weekday, hour, minute
_FEATURE_OFFSETS = (0, 13, 45, 52, 76)
_FUSED_ROWS = 128                     # 80 real rows padded to one MXU K pass
_FPAD = 8                             # index columns per packed band (>= 5)
_VMEM_BUDGET_BYTES = 12 * 1024 * 1024


def _fixed_embedding_table(c_in, d_model):
    """Sinusoidal table identical to FixedEmbedding.__init__ (deterministic)."""
    position = np.arange(c_in, dtype=np.float32)[:, None]
    div_term = np.exp(np.arange(0, d_model, 2, dtype=np.float32)
                      * -(math.log(10000.0) / d_model))
    w = np.zeros((c_in, d_model), dtype=np.float32)
    w[:, 0::2] = np.sin(position * div_term)
    w[:, 1::2] = np.cos(position * div_term)
    return w


def _temporal_embedding_kernel(idx_ref, sel_ref, tbl_ref, o_ref):
    """One row tile.

    idx_ref: (TILE, pack*_FPAD) int32 raw time features (zero-padded per band).
    sel_ref: (pack*_FPAD, pack*128) f32 0/1 selector mapping each fused-table
             column to its owning (band, feature) index column.
    tbl_ref: (pack*128, d_out) f32 block-diagonal fused sinusoid table.
    o_ref:   (TILE, d_out) output tile, d_out a multiple of 128 (lane dense).
    """
    idx = idx_ref[...]

    # --- clip raw features into range and add fused-table offsets ---
    # (narrow (TILE, pack*8) block; a handful of VPU ops, hidden under MXU)
    f = jax.lax.broadcasted_iota(jnp.int32, idx.shape, 1) % _FPAD
    hi = jnp.where(f == 0, 12,
         jnp.where(f == 1, 31,
         jnp.where(f == 2, 6,
         jnp.where(f == 3, 23, 3))))
    off = jnp.where(f == 0, 0,
          jnp.where(f == 1, 13,
          jnp.where(f == 2, 45,
          jnp.where(f == 3, 52, 76))))
    idx = jnp.clip(idx, 0, hi) + off

    # --- sel[r, c] = offset-index of the feature owning fused column c ---
    # (exact: 0/1 selector and integer values <= 79; default precision fine)
    sel = jnp.dot(idx.astype(jnp.float32), sel_ref[...],
                  preferred_element_type=jnp.float32)

    # --- multi-hot over the fused-table rows with ONE full-width compare ---
    j = (jax.lax.broadcasted_iota(jnp.int32, sel.shape, 1) % _FUSED_ROWS
         ).astype(jnp.float32)
    onehot = jnp.where(sel == j, 1.0, 0.0).astype(jnp.float32)

    # --- one MXU matmul performs all lookups + the feature sum ---
    o_ref[...] = jnp.dot(onehot, tbl_ref[...],
                         preferred_element_type=jnp.float32,
                         precision=jax.lax.Precision.HIGHEST).astype(o_ref.dtype)


def temporal_embedding(x, d_model, freq="h", out_dtype=jnp.float32):
    """Pallas TPU forward of TemporalEmbedding(d_model, embed_type='fixed', freq)."""
    if d_model % 2:
        raise ValueError(f"d_model must be even (sin/cos interleave), got {d_model}")
    B, L, F = x.shape
    f_used = 5 if freq == "t" else 4
    if F < f_used:
        raise ValueError(f"need at least {f_used} time features, got {F}")

    # ---- lane-dense output layout ----
    if d_model % 128 == 0:
        pack, d_out = 1, d_model
    elif 128 % d_model == 0:
        pack, d_out = 128 // d_model, 128           # pack rows onto one lane-row
    else:
        pack, d_out = 1, ((d_model + 127) // 128) * 128   # pad columns

    K = pack * _FUSED_ROWS
    fk = pack * _FPAD

    # ---- block-diagonal fused sinusoid table: (K, d_out) ----
    fused = np.zeros((_FUSED_ROWS, d_model), np.float32)
    for f in range(f_used):
        o, s = _FEATURE_OFFSETS[f], _FEATURE_SIZES[f]
        fused[o:o + s, :] = _fixed_embedding_table(s, d_model)
    ktbl = np.zeros((K, d_out), np.float32)
    for p in range(pack):
        ktbl[p * _FUSED_ROWS:(p + 1) * _FUSED_ROWS,
             p * d_model:(p + 1) * d_model] = fused

    # ---- selector: (band, feature) index column -> its fused columns ----
    selector = np.zeros((fk, K), np.float32)
    for p in range(pack):
        for f in range(f_used):
            c0 = p * _FUSED_ROWS + _FEATURE_OFFSETS[f]
            selector[p * _FPAD + f, c0:c0 + _FEATURE_SIZES[f]] = 1.0

    # ---- row tiling from an explicit VMEM budget ----
    N = B * L
    nr_needed = -(-N // pack)                        # ceil(N / pack)
    # idx dbl-buf + out dbl-buf + sel/one-hot intermediates, per kernel row
    per_row_bytes = 2 * fk * 4 + 2 * d_out * 4 + 2 * K * 4
    tile = _VMEM_BUDGET_BYTES // per_row_bytes
    tile = min(tile, 8192)
    if nr_needed >= 32:                              # keep >=4 steps for v7x's 2 TCs
        tile = min(tile, -(-nr_needed // 4))
    tile = min(tile, nr_needed)
    tile = max(8, (tile // 8) * 8)                   # sublane-aligned
    NR = -(-nr_needed // tile) * tile
    n_pad = NR * pack

    # ---- raw indices: slice used features, pad rows & per-band columns ----
    idx = x[..., :f_used].reshape(N, f_used).astype(jnp.int32)
    idx = jnp.pad(idx, ((0, n_pad - N), (0, _FPAD - f_used)))
    idx = idx.reshape(NR, fk)

    out_itemsize = jnp.dtype(out_dtype).itemsize
    grid = (NR // tile,)

    out = pl.pallas_call(
        _temporal_embedding_kernel,
        out_shape=jax.ShapeDtypeStruct((NR, d_out), out_dtype),
        grid_spec=pltpu.PrefetchScalarGridSpec(
            num_scalar_prefetch=0,
            grid=grid,
            in_specs=[
                pl.BlockSpec((tile, fk), lambda i: (i, 0)),
                pl.BlockSpec((fk, K), lambda i: (0, 0)),
                pl.BlockSpec((K, d_out), lambda i: (0, 0)),
            ],
            out_specs=pl.BlockSpec((tile, d_out), lambda i: (i, 0)),
        ),
        compiler_params=pltpu.CompilerParams(
            dimension_semantics=("parallel",),
            vmem_limit_bytes=32 * 1024 * 1024,       # v5e default is only 16 MiB
        ),
        cost_estimate=pl.CostEstimate(
            flops=2 * NR * fk * K + 2 * NR * K * d_out,
            transcendentals=0,
            bytes_accessed=NR * fk * 4 + NR * d_out * out_itemsize
                           + (fk * K + K * d_out) * 4,
        ),
    )(idx, jnp.asarray(selector), jnp.asarray(ktbl))

    out = out.reshape(n_pad, d_out // pack)[:N, :d_model]
    return out.reshape(B, L, d_model)


def _reference(x, d_model, freq="h"):
    """Pure-JAX reference mirroring the PyTorch forward."""
    x = x.astype(jnp.int32)
    tbl = lambda n: jnp.asarray(_fixed_embedding_table(n, d_model))
    month = jnp.take(tbl(13), x[:, :, 0], axis=0)
    day = jnp.take(tbl(32), x[:, :, 1], axis=0)
    weekday = jnp.take(tbl(7), x[:, :, 2], axis=0)
    hour = jnp.take(tbl(24), x[:, :, 3], axis=0)
    minute = jnp.take(tbl(4), x[:, :, 4], axis=0) if freq == "t" else 0.0
    return hour + weekday + day + month + minute


if __name__ == "__main__":
    key = jax.random.PRNGKey(0)

    def make_x(B, L):
        ks = jax.random.split(key, 5)
        cols = [jax.random.randint(k, (B, L, 1), 0, hi, dtype=jnp.int32)
                for k, hi in zip(ks, _FEATURE_SIZES)]
        return jnp.concatenate(cols, axis=-1)          # (B, L, 5)

    ok = True
    cases = [
        (2, 8, 32, "t"),     # packed lanes (pack=4), 5 features
        (2, 8, 32, "h"),     # 4 features
        (2, 8, 128, "t"),    # lane-aligned, no packing
        (2, 8, 96, "h"),     # column-padded output path
        (2, 256, 32, "t"),   # multi-step grid (exercises row tiling)
    ]
    for B, L, d_model, freq in cases:
        x = make_x(B, L)
        out = jax.block_until_ready(temporal_embedding(x, d_model, freq=freq))
        ref = _reference(x, d_model, freq=freq)
        ok = ok and (out.shape == (B, L, d_model))
        ok = ok and bool(jnp.allclose(out, ref, atol=1e-5, rtol=1e-5))

    # optional bf16 writeback path (halves HBM traffic); looser tolerance
    x = make_x(2, 8)
    out_bf16 = jax.block_until_ready(
        temporal_embedding(x, 128, freq="t", out_dtype=jnp.bfloat16))
    ref = _reference(x, 128, freq="t")
    ok = ok and bool(jnp.allclose(out_bf16.astype(jnp.float32), ref,
                                  atol=2e-2, rtol=2e-2))

    assert ok
    print("KERNEL_OK")
</pallas_src>

<mosaic_0001>
module attributes {stable_mosaic.version = 11 : i64} {
  func.func @_temporal_embedding_kernel(%arg0: i32, %arg1: memref<8x32xi32, #tpu.memory_space<vmem>>, %arg2: memref<32x512xf32, #tpu.memory_space<vmem>>, %arg3: memref<512x128xf32, #tpu.memory_space<vmem>>, %arg4: memref<8x128xf32, #tpu.memory_space<vmem>>) attributes {dimension_semantics = [#tpu.dimension_semantics<parallel>], iteration_bounds = array<i64: 1>, scalar_prefetch = 0 : i64, scratch_operands = 0 : i64, tpu.core_type = #tpu.core_type<tc>, window_params = [{transform_indices = @transform_0, window_bounds = array<i64: 8, 32>}, {pipeline_mode = #tpu.pipeline_mode<synchronous>, transform_indices = @transform_1, window_bounds = array<i64: 32, 512>}, {pipeline_mode = #tpu.pipeline_mode<synchronous>, transform_indices = @transform_2, window_bounds = array<i64: 512, 128>}, {transform_indices = @transform_3, window_bounds = array<i64: 8, 128>}]} {
    %c0 = arith.constant 0 : index
    %c0_0 = arith.constant 0 : index
    %0 = vector.load %arg1[%c0, %c0_0] : memref<8x32xi32, #tpu.memory_space<vmem>>, vector<8x32xi32>
    %1 = tpu.iota {dimensions = array<i32: 1>} : vector<8x32xi32>
    %c8_i32 = arith.constant 8 : i32
    %c0_i32 = arith.constant 0 : i32
    %2 = arith.cmpi eq, %c8_i32, %c0_i32 : i32
    %c1_i32 = arith.constant 1 : i32
    %3 = arith.select %2, %c1_i32, %c8_i32 : i32
    %4 = vector.broadcast %3 : i32 to vector<8x32xi32>
    %5 = arith.remsi %1, %4 : vector<8x32xi32>
    %c0_i32_1 = arith.constant 0 : i32
    %6 = vector.broadcast %c0_i32_1 : i32 to vector<8x32xi32>
    %7 = arith.cmpi ne, %5, %6 : vector<8x32xi32>
    %c0_i32_2 = arith.constant 0 : i32
    %8 = vector.broadcast %c0_i32_2 : i32 to vector<8x32xi32>
    %9 = arith.cmpi slt, %5, %8 : vector<8x32xi32>
    %c0_i32_3 = arith.constant 0 : i32
    %10 = arith.cmpi slt, %3, %c0_i32_3 : i32
    %11 = vector.broadcast %10 : i1 to vector<8x32xi1>
    %12 = vector.broadcast %11 : vector<8x32xi1> to vector<8x32xi1>
    %13 = arith.xori %9, %12 : vector<8x32xi1>
    %14 = arith.andi %13, %7 : vector<8x32xi1>
    %15 = vector.broadcast %3 : i32 to vector<8x32xi32>
    %16 = arith.addi %5, %15 : vector<8x32xi32>
    %17 = arith.select %14, %16, %5 : vector<8x32xi1>, vector<8x32xi32>
    %c0_i32_4 = arith.constant 0 : i32
    %18 = vector.broadcast %c0_i32_4 : i32 to vector<8x32xi32>
    %19 = arith.cmpi eq, %17, %18 : vector<8x32xi32>
    %c1_i32_5 = arith.constant 1 : i32
    %20 = vector.broadcast %c1_i32_5 : i32 to vector<8x32xi32>
    %21 = arith.cmpi eq, %17, %20 : vector<8x32xi32>
    %c2_i32 = arith.constant 2 : i32
    %22 = vector.broadcast %c2_i32 : i32 to vector<8x32xi32>
    %23 = arith.cmpi eq, %17, %22 : vector<8x32xi32>
    %c3_i32 = arith.constant 3 : i32
    %24 = vector.broadcast %c3_i32 : i32 to vector<8x32xi32>
    %25 = arith.cmpi eq, %17, %24 : vector<8x32xi32>
    %c23_i32 = arith.constant 23 : i32
    %c3_i32_6 = arith.constant 3 : i32
    %26 = vector.broadcast %c23_i32 : i32 to vector<8x32xi32>
    %27 = vector.broadcast %c3_i32_6 : i32 to vector<8x32xi32>
    %28 = arith.select %25, %26, %27 : vector<8x32xi1>, vector<8x32xi32>
    %c6_i32 = arith.constant 6 : i32
    %29 = vector.broadcast %c6_i32 : i32 to vector<8x32xi32>
    %30 = arith.select %23, %29, %28 : vector<8x32xi1>, vector<8x32xi32>
    %c31_i32 = arith.constant 31 : i32
    %31 = vector.broadcast %c31_i32 : i32 to vector<8x32xi32>
    %32 = arith.select %21, %31, %30 : vector<8x32xi1>, vector<8x32xi32>
    %c12_i32 = arith.constant 12 : i32
    %33 = vector.broadcast %c12_i32 : i32 to vector<8x32xi32>
    %34 = arith.select %19, %33, %32 : vector<8x32xi1>, vector<8x32xi32>
    %c0_i32_7 = arith.constant 0 : i32
    %35 = vector.broadcast %c0_i32_7 : i32 to vector<8x32xi32>
    %36 = arith.cmpi eq, %17, %35 : vector<8x32xi32>
    %c1_i32_8 = arith.constant 1 : i32
    %37 = vector.broadcast %c1_i32_8 : i32 to vector<8x32xi32>
    %38 = arith.cmpi eq, %17, %37 : vector<8x32xi32>
    %c2_i32_9 = arith.constant 2 : i32
    %39 = vector.broadcast %c2_i32_9 : i32 to vector<8x32xi32>
    %40 = arith.cmpi eq, %17, %39 : vector<8x32xi32>
    %c3_i32_10 = arith.constant 3 : i32
    %41 = vector.broadcast %c3_i32_10 : i32 to vector<8x32xi32>
    %42 = arith.cmpi eq, %17, %41 : vector<8x32xi32>
    %c52_i32 = arith.constant 52 : i32
    %c76_i32 = arith.constant 76 : i32
    %43 = vector.broadcast %c52_i32 : i32 to vector<8x32xi32>
    %44 = vector.broadcast %c76_i32 : i32 to vector<8x32xi32>
    %45 = arith.select %42, %43, %44 : vector<8x32xi1>, vector<8x32xi32>
    %c45_i32 = arith.constant 45 : i32
    %46 = vector.broadcast %c45_i32 : i32 to vector<8x32xi32>
    %47 = arith.select %40, %46, %45 : vector<8x32xi1>, vector<8x32xi32>
    %c13_i32 = arith.constant 13 : i32
    %48 = vector.broadcast %c13_i32 : i32 to vector<8x32xi32>
    %49 = arith.select %38, %48, %47 : vector<8x32xi1>, vector<8x32xi32>
    %c0_i32_11 = arith.constant 0 : i32
    %50 = vector.broadcast %c0_i32_11 : i32 to vector<8x32xi32>
    %51 = arith.select %36, %50, %49 : vector<8x32xi1>, vector<8x32xi32>
    %c0_i32_12 = arith.constant 0 : i32
    %52 = vector.broadcast %c0_i32_12 : i32 to vector<8x32xi32>
    %53 = arith.maxsi %52, %0 : vector<8x32xi32>
    %54 = arith.minsi %34, %53 : vector<8x32xi32>
    %55 = arith.addi %54, %51 : vector<8x32xi32>
    %56 = arith.sitofp %55 : vector<8x32xi32> to vector<8x32xf32>
    %c0_13 = arith.constant 0 : index
    %c0_14 = arith.constant 0 : index
    %57 = vector.load %arg2[%c0_13, %c0_14] : memref<32x512xf32, #tpu.memory_space<vmem>>, vector<32x512xf32>
    %cst = arith.constant dense<0.000000e+00> : vector<8x512xf32>
    %58 = tpu.matmul %56, %57, %cst {dimension_numbers = #tpu.dot_dimension_numbers<[1], [0], [0], [1], [0, 0, 1, 1], [], []>} : vector<8x32xf32>, vector<32x512xf32>, vector<8x512xf32> -> vector<8x512xf32>
    %59 = tpu.iota {dimensions = array<i32: 1>} : vector<8x512xi32>
    %c128_i32 = arith.constant 128 : i32
    %c0_i32_15 = arith.constant 0 : i32
    %60 = arith.cmpi eq, %c128_i32, %c0_i32_15 : i32
    %c1_i32_16 = arith.constant 1 : i32
    %61 = arith.select %60, %c1_i32_16, %c128_i32 : i32
    %62 = vector.broadcast %61 : i32 to vector<8x512xi32>
    %63 = arith.remsi %59, %62 : vector<8x512xi32>
    %c0_i32_17 = arith.constant 0 : i32
    %64 = vector.broadcast %c0_i32_17 : i32 to vector<8x512xi32>
    %65 = arith.cmpi ne, %63, %64 : vector<8x512xi32>
    %c0_i32_18 = arith.constant 0 : i32
    %66 = vector.broadcast %c0_i32_18 : i32 to vector<8x512xi32>
    %67 = arith.cmpi slt, %63, %66 : vector<8x512xi32>
    %c0_i32_19 = arith.constant 0 : i32
    %68 = arith.cmpi slt, %61, %c0_i32_19 : i32
    %69 = vector.broadcast %68 : i1 to vector<8x512xi1>
    %70 = vector.broadcast %69 : vector<8x512xi1> to vector<8x512xi1>
    %71 = arith.xori %67, %70 : vector<8x512xi1>
    %72 = arith.andi %71, %65 : vector<8x512xi1>
    %73 = vector.broadcast %61 : i32 to vector<8x512xi32>
    %74 = arith.addi %63, %73 : vector<8x512xi32>
    %75 = arith.select %72, %74, %63 : vector<8x512xi1>, vector<8x512xi32>
    %76 = arith.sitofp %75 : vector<8x512xi32> to vector<8x512xf32>
    %77 = arith.cmpf oeq, %58, %76 : vector<8x512xf32>
    %cst_20 = arith.constant 1.000000e+00 : f32
    %cst_21 = arith.constant 0.000000e+00 : f32
    %78 = vector.broadcast %cst_20 : f32 to vector<8x512xf32>
    %79 = vector.broadcast %cst_21 : f32 to vector<8x512xf32>
    %80 = arith.select %77, %78, %79 : vector<8x512xi1>, vector<8x512xf32>
    %c0_22 = arith.constant 0 : index
    %c0_23 = arith.constant 0 : index
    %81 = vector.load %arg3[%c0_22, %c0_23] : memref<512x128xf32, #tpu.memory_space<vmem>>, vector<512x128xf32>
    %cst_24 = arith.constant dense<0.000000e+00> : vector<8x128xf32>
    %82 = tpu.matmul %80, %81, %cst_24 {dimension_numbers = #tpu.dot_dimension_numbers<[1], [0], [0], [1], [0, 0, 1, 1], [], []>, precision = #tpu.contract_precision<fp32>} : vector<8x512xf32>, vector<512x128xf32>, vector<8x128xf32> -> vector<8x128xf32>
    %c0_25 = arith.constant 0 : index
    %c0_26 = arith.constant 0 : index
    %83 = vector.load %arg4[%c0_25, %c0_26] : memref<8x128xf32, #tpu.memory_space<vmem>>, vector<8x128xf32>
    tpu.vector_store %arg4[%c0_25, %c0_26], %82 {strides = array<i32>} : memref<8x128xf32, #tpu.memory_space<vmem>>, vector<8x128xf32>,
    return
  }
  func.func @transform_0(%arg0: i32) -> (i32, i32) {
    %c0_i32 = arith.constant 0 : i32
    %c0_i32_0 = arith.constant 0 : i32
    return %arg0, %c0_i32 : i32, i32
  }
  func.func @transform_1(%arg0: i32) -> (i32, i32) {
    %c0_i32 = arith.constant 0 : i32
    %c0_i32_0 = arith.constant 0 : i32
    %c0_i32_1 = arith.constant 0 : i32
    return %c0_i32, %c0_i32_0 : i32, i32
  }
  func.func @transform_2(%arg0: i32) -> (i32, i32) {
    %c0_i32 = arith.constant 0 : i32
    %c0_i32_0 = arith.constant 0 : i32
    %c0_i32_1 = arith.constant 0 : i32
    return %c0_i32, %c0_i32_0 : i32, i32
  }
  func.func @transform_3(%arg0: i32) -> (i32, i32) {
    %c0_i32 = arith.constant 0 : i32
    %c0_i32_0 = arith.constant 0 : i32
    return %arg0, %c0_i32 : i32, i32
  }
}

</mosaic_0001>

<llo_original>
// kernel: tpu_custom_call.1
$region0: #{tpu_custom_call.1}
  #allocation0 [shape = 'u32[]', space=smem, size = 0x4, offset = 0x4, fixed_abs, tag = 'smem constant byte address 0x4 - core index']
  #allocation1 [shape = 'u32[72,128]{1,0:T(1,128)}', space=vmem, size = 0x9000, scoped, tag = 'internal scratch']
  %s0 = inlined_call_operand.hbm [shape: s32[8,32], index: 0, kind: input, shape index: {}]
  %s1 = inlined_call_operand.hbm [shape: f32[32,512], index: 1, kind: input, shape index: {}]
  %s2 = inlined_call_operand.hbm [shape: f32[512,128], index: 2, kind: input, shape index: {}]
  %s3 = inlined_call_operand.hbm [shape: f32[8,128], index: 3, kind: output, shape index: {}]
  %s4 = sld [smem:[#allocation0]]
  $region34: #{tpu_custom_call.1} parent=0
    _
  %s6 = ssub.s32 1, %s4
  %s7 = scalar_select 0, %s6, %s4
  $region1: #{tpu_custom_call.1} parent=0
    #allocation2 [shape = 'u8[4096]{0}', space=vmem, size = 0x1000, scoped, tag = 'input window, operand 0, single buffered']
    #allocation3 [shape = 's32[1]{0}', space=sflag, size = 0x4, scoped, tag = 'scoped memory for tpu_custom_call.1']
    #allocation4 [shape = 's32[1]{0}', space=sflag, size = 0x4, scoped, tag = 'scoped memory for tpu_custom_call.1']
    #allocation5 [shape = 'u8[65536]{0}', space=vmem, size = 0x10000, scoped, tag = 'input window, operand 1, single buffered']
    #allocation6 [shape = 's32[1]{0}', space=sflag, size = 0x4, scoped, tag = 'scoped memory for tpu_custom_call.1']
    #allocation7 [shape = 'u8[262144]{0}', space=vmem, size = 0x40000, scoped, tag = 'input window, operand 2, single buffered']
    #allocation8 [shape = 'u8[4096]{0}', space=vmem, size = 0x1000, scoped, tag = 'output window, operand 0, single buffered']
    %8 = vsyncpa [#allocation3], 0
    %9 = vsyncpa [#allocation6], 0
    %10 = vsyncpa [#allocation4], 0
    // Predicated region
    $region2: #{tpu_custom_call.1} parent=1 // pred_check
      _
    $region3: #{tpu_custom_call.1} parent=1 // pred_check_branch
      %12 = sbr.rel (0) target = $region5
    $region4: #{tpu_custom_call.1} parent=1 // pred_region
      %14 = vsyncadd [#allocation3], 0
      %s16 = sshll.u32 %s0, 4
      %s17 = int_to_ptr.hbm [resolvable:$true] %s16
      %s18 = sshll.u32 [#allocation2], 4
      %s19 = int_to_ptr.vmem [resolvable:$true] %s18
      %21 = dma.hbm_to_vmem [thread:$0]  %s17, 128, %s19, [#allocation3]
    $region5: #{tpu_custom_call.1} parent=1 // pred_fallthru
      _
    // Predicated region
    $region6: #{tpu_custom_call.1} parent=1 // pred_check
      _
    $region7: #{tpu_custom_call.1} parent=1 // pred_check_branch
      %23 = sbr.rel (0) target = $region9
    $region8: #{tpu_custom_call.1} parent=1 // pred_region
      %25 = vsyncadd [#allocation6], 0
      %s26 = sshll.u32 %s1, 4
      %s27 = int_to_ptr.hbm [resolvable:$true] %s26
      %s28 = sshll.u32 [#allocation5], 4
      %s29 = int_to_ptr.vmem [resolvable:$true] %s28
      %34 = dma.hbm_to_vmem [thread:$0]  %s27, 2048, %s29, [#allocation6], 512, 512, 32
    $region9: #{tpu_custom_call.1} parent=1 // pred_fallthru
      _
    // Predicated region
    $region10: #{tpu_custom_call.1} parent=1 // pred_check
      _
    $region11: #{tpu_custom_call.1} parent=1 // pred_check_branch
      %36 = sbr.rel (0) target = $region13
    $region12: #{tpu_custom_call.1} parent=1 // pred_region
      %38 = vsyncadd [#allocation6], 0
      %s39 = sshll.u32 %s2, 4
      %s40 = int_to_ptr.hbm [resolvable:$true] %s39
      %s41 = sshll.u32 [#allocation7], 4
      %s42 = int_to_ptr.vmem [resolvable:$true] %s41
      %47 = dma.hbm_to_vmem [thread:$0]  %s40, 8192, %s42, [#allocation6], 128, 128, 8
    $region13: #{tpu_custom_call.1} parent=1 // pred_fallthru
      _
    // Predicated region
    $region14: #{tpu_custom_call.1} parent=1 // pred_check
      _
    $region15: #{tpu_custom_call.1} parent=1 // pred_check_branch
      %49 = sbr.rel (0) target = $region17
    $region16: #{tpu_custom_call.1} parent=1 // pred_region
      %51 = dma.done [#allocation3], 128
    $region17: #{tpu_custom_call.1} parent=1 // pred_fallthru
      _
    // Predicated region
    $region18: #{tpu_custom_call.1} parent=1 // pred_check
      _
    $region19: #{tpu_custom_call.1} parent=1 // pred_check_branch
      %53 = sbr.rel (0) target = $region21
    $region20: #{tpu_custom_call.1} parent=1 // pred_region
      %55 = dma.done [#allocation6], 2048
    $region21: #{tpu_custom_call.1} parent=1 // pred_fallthru
      _
    // Predicated region
    $region22: #{tpu_custom_call.1} parent=1 // pred_check
      _
    $region23: #{tpu_custom_call.1} parent=1 // pred_check_branch
      %57 = sbr.rel (0) target = $region25
    $region24: #{tpu_custom_call.1} parent=1 // pred_region
      %59 = dma.done [#allocation6], 8192
    $region25: #{tpu_custom_call.1} parent=1 // pred_fallthru
      _
    %v60 = vld [vmem:[#allocation2] sm:$0xff]
    %v61 = vlaneseq
    %v62 = vand.u32 %v61, 127
    %vm63 = vcmp.lt.s32.totalorder %v62, 0
    %v64 = vsub.s32 0, %v62
    %v65 = vsel %vm63, %v64, %v62
    %v66 = vshrl.u32 %v65, 3
    %v67 = vand.u32 %v65, 7
    %v68 = vsub.s32 0, %v67
    %v69 = vsel %vm63, %v68, %v67
    %vm70 = vcmp.ne.s32.totalorder %v69, 0
    %vm71 = vcmp.lt.s32.totalorder %v69, 0
    %vm72 = vmand %vm71, %vm70
    %v73 = vadd.s32 %v69, 8
    %v74 = vsel %vm72, %v73, %v69
    %vm75 = vcmp.eq.s32.totalorder %v74, 0
    %vm76 = vcmp.eq.s32.totalorder %v74, 1
    %vm77 = vcmp.eq.s32.totalorder %v74, 2
    %vm78 = vcmp.eq.s32.totalorder %v74, 3
    %v79 = vsel %vm78, 23, 3
    %v80 = vsel %vm77, 6, %v79
    %v81 = vsel %vm76, 31, %v80
    %v82 = vsel %vm75, 12, %v81
    %v83 = vsel %vm78, 52, 76
    %v84 = vsel %vm77, 45, %v83
    %v85 = vsel %vm76, 13, %v84
    %v86 = vsel %vm75, 0, %v85
    %vm87 = vcmp.gt.s32.totalorder %v60, 0
    %v88 = vsel %vm87, %v60, 0
    %vm89 = vcmp.lt.s32.totalorder %v82, %v88
    %v90 = vsel %vm89, %v82, %v88
    %v91 = vadd.s32 %v90, %v86
    %v92 = vcvt.s32.f32 %v91
    %v93 = vld [vmem:[#allocation5] sm:$0xff]
    %v94 = vld [vmem:[#allocation5 + $0x8] sm:$0xff]
    %v95 = vld [vmem:[#allocation5 + $0x10] sm:$0xff]
    %v96 = vld [vmem:[#allocation5 + $0x18] sm:$0xff]
    %v97 = vld [vmem:[#allocation5 + $0x20] sm:$0xff]
    %v98 = vld [vmem:[#allocation5 + $0x28] sm:$0xff]
    %v99 = vld [vmem:[#allocation5 + $0x30] sm:$0xff]
    %v100 = vld [vmem:[#allocation5 + $0x38] sm:$0xff]
    %v101 = vld [vmem:[#allocation5 + $0x40] sm:$0xff]
    %v102 = vld [vmem:[#allocation5 + $0x48] sm:$0xff]
    %v103 = vld [vmem:[#allocation5 + $0x50] sm:$0xff]
    %v104 = vld [vmem:[#allocation5 + $0x58] sm:$0xff]
    %v105 = vld [vmem:[#allocation5 + $0x60] sm:$0xff]
    %v106 = vld [vmem:[#allocation5 + $0x68] sm:$0xff]
    %v107 = vld [vmem:[#allocation5 + $0x70] sm:$0xff]
    %v108 = vld [vmem:[#allocation5 + $0x78] sm:$0xff]
    %vm109 = vcmask 261120
    %v111 = vsel %vm109, %v92, 0
    %113 = vmatpush.msra.mxu0 0.0
    %114 = vmatpush.msra.mxu0 0.0
    %115 = vmatpush.msra.mxu0 0.0
    %116 = vmatpush.msra.mxu0 0.0
    %117 = vmatpush.msra.mxu0 0.0
    %118 = vmatpush.msra.mxu0 0.0
    %119 = vmatpush.msra.mxu0 0.0
    %120 = vmatpush.msra.mxu0 0.0
    %121 = vmatpush.msra.mxu0 0.0
    %122 = vmatpush.msra.mxu0 0.0
    %123 = vmatpush.msra.mxu0 0.0
    %124 = vmatpush.msra.mxu0 0.0
    %125 = vmatpush.msra.mxu0 %v105
    %126 = vmatpush.msra.mxu0 %v101
    %127 = vmatpush.msra.mxu0 %v97
    %128 = vmatpush.msra.mxu0 %v93
    %129 = vmatmul.f32.gmra.mxu0 %v111
    %v130 = vpop.f32.mrf.mxu0
    %v131 = vadd.f32 0.0, %v130
    %132 = vdwg.mxu0
    %133 = vmatpush.msra.mxu0 0.0
    %134 = vmatpush.msra.mxu0 0.0
    %135 = vmatpush.msra.mxu0 0.0
    %136 = vmatpush.msra.mxu0 0.0
    %137 = vmatpush.msra.mxu0 0.0
    %138 = vmatpush.msra.mxu0 0.0
    %139 = vmatpush.msra.mxu0 0.0
    %140 = vmatpush.msra.mxu0 0.0
    %141 = vmatpush.msra.mxu0 0.0
    %142 = vmatpush.msra.mxu0 0.0
    %143 = vmatpush.msra.mxu0 0.0
    %144 = vmatpush.msra.mxu0 0.0
    %145 = vmatpush.msra.mxu0 %v106
    %146 = vmatpush.msra.mxu0 %v102
    %147 = vmatpush.msra.mxu0 %v98
    %148 = vmatpush.msra.mxu0 %v94
    %149 = vmatmul.f32.gmra.mxu0 %v111
    %v150 = vpop.f32.mrf.mxu0
    %v151 = vadd.f32 0.0, %v150
    %152 = vdwg.mxu0
    %153 = vmatpush.msra.mxu0 0.0
    %154 = vmatpush.msra.mxu0 0.0
    %155 = vmatpush.msra.mxu0 0.0
    %156 = vmatpush.msra.mxu0 0.0
    %157 = vmatpush.msra.mxu0 0.0
    %158 = vmatpush.msra.mxu0 0.0
    %159 = vmatpush.msra.mxu0 0.0
    %160 = vmatpush.msra.mxu0 0.0
    %161 = vmatpush.msra.mxu0 0.0
    %162 = vmatpush.msra.mxu0 0.0
    %163 = vmatpush.msra.mxu0 0.0
    %164 = vmatpush.msra.mxu0 0.0
    %165 = vmatpush.msra.mxu0 %v107
    %166 = vmatpush.msra.mxu0 %v103
    %167 = vmatpush.msra.mxu0 %v99
    %168 = vmatpush.msra.mxu0 %v95
    %169 = vmatmul.f32.gmra.mxu0 %v111
    %v170 = vpop.f32.mrf.mxu0
    %v171 = vadd.f32 0.0, %v170
    %172 = vdwg.mxu0
    %173 = vmatpush.msra.mxu0 0.0
    %174 = vmatpush.msra.mxu0 0.0
    %175 = vmatpush.msra.mxu0 0.0
    %176 = vmatpush.msra.mxu0 0.0
    %177 = vmatpush.msra.mxu0 0.0
    %178 = vmatpush.msra.mxu0 0.0
    %179 = vmatpush.msra.mxu0 0.0
    %180 = vmatpush.msra.mxu0 0.0
    %181 = vmatpush.msra.mxu0 0.0
    %182 = vmatpush.msra.mxu0 0.0
    %183 = vmatpush.msra.mxu0 0.0
    %184 = vmatpush.msra.mxu0 0.0
    %185 = vmatpush.msra.mxu0 %v108
    %186 = vmatpush.msra.mxu0 %v104
    %187 = vmatpush.msra.mxu0 %v100
    %188 = vmatpush.msra.mxu0 %v96
    %189 = vmatmul.f32.gmra.mxu0 %v111
    %v190 = vpop.f32.mrf.mxu0
    %v191 = vadd.f32 0.0, %v190
    %192 = vdwg.mxu0
    %v193 = vadd.s32 %v62, 128
    %v194 = vadd.s32 %v62, 256
    %v195 = vadd.s32 %v62, 384
    %vm196 = vcmp.lt.s32.totalorder %v62, 0
    %v197 = vsub.s32 0, %v62
    %v198 = vsel %vm196, %v197, %v62
    %v199 = vshrl.u32 %v198, 7
    %v200 = vand.u32 %v198, 127
    %v201 = vsub.s32 0, %v200
    %v202 = vsel %vm196, %v201, %v200
    %vm203 = vcmp.lt.s32.totalorder %v193, 0
    %v204 = vsub.s32 0, %v193
    %v205 = vsel %vm203, %v204, %v193
    %v206 = vshrl.u32 %v205, 7
    %v207 = vand.u32 %v205, 127
    %v208 = vsub.s32 0, %v207
    %v209 = vsel %vm203, %v208, %v207
    %vm210 = vcmp.lt.s32.totalorder %v194, 0
    %v211 = vsub.s32 0, %v194
    %v212 = vsel %vm210, %v211, %v194
    %v213 = vshrl.u32 %v212, 7
    %v214 = vand.u32 %v212, 127
    %v215 = vsub.s32 0, %v214
    %v216 = vsel %vm210, %v215, %v214
    %vm217 = vcmp.lt.s32.totalorder %v195, 0
    %v218 = vsub.s32 0, %v195
    %v219 = vsel %vm217, %v218, %v195
    %v220 = vshrl.u32 %v219, 7
    %v221 = vand.u32 %v219, 127
    %v222 = vsub.s32 0, %v221
    %v223 = vsel %vm217, %v222, %v221
    %vm224 = vcmp.ne.s32.totalorder %v202, 0
    %vm225 = vcmp.ne.s32.totalorder %v209, 0
    %vm226 = vcmp.ne.s32.totalorder %v216, 0
    %vm227 = vcmp.ne.s32.totalorder %v223, 0
    %vm228 = vcmp.lt.s32.totalorder %v202, 0
    %vm229 = vcmp.lt.s32.totalorder %v209, 0
    %vm230 = vcmp.lt.s32.totalorder %v216, 0
    %vm231 = vcmp.lt.s32.totalorder %v223, 0
    %vm232 = vmand %vm228, %vm224
    %vm233 = vmand %vm229, %vm225
    %vm234 = vmand %vm230, %vm226
    %vm235 = vmand %vm231, %vm227
    %v236 = vadd.s32 %v202, 128
    %v237 = vadd.s32 %v209, 128
    %v238 = vadd.s32 %v216, 128
    %v239 = vadd.s32 %v223, 128
    %v240 = vsel %vm232, %v236, %v202
    %v241 = vsel %vm233, %v237, %v209
    %v242 = vsel %vm234, %v238, %v216
    %v243 = vsel %vm235, %v239, %v223
    %v244 = vcvt.s32.f32 %v240
    %v245 = vcvt.s32.f32 %v241
    %v246 = vcvt.s32.f32 %v242
    %v247 = vcvt.s32.f32 %v243
    %vm248 = vcmp.eq.f32.partialorder %v131, %v244
    %vm249 = vcmp.eq.f32.partialorder %v151, %v245
    %vm250 = vcmp.eq.f32.partialorder %v171, %v246
    %vm251 = vcmp.eq.f32.partialorder %v191, %v247
    %v252 = vsel %vm248, 1.0, 0.0
    %v253 = vsel %vm249, 1.0, 0.0
    %v254 = vsel %vm250, 1.0, 0.0
    %v255 = vsel %vm251, 1.0, 0.0
    %v256 = vld [vmem:[#allocation7] sm:$0xff]
    %v257 = vld [vmem:[#allocation7 + $0x8] sm:$0xff]
    %v258 = vld [vmem:[#allocation7 + $0x10] sm:$0xff]
    %v259 = vld [vmem:[#allocation7 + $0x18] sm:$0xff]
    %v260 = vld [vmem:[#allocation7 + $0x20] sm:$0xff]
    %v261 = vld [vmem:[#allocation7 + $0x28] sm:$0xff]
    %v262 = vld [vmem:[#allocation7 + $0x30] sm:$0xff]
    %v263 = vld [vmem:[#allocation7 + $0x38] sm:$0xff]
    %v264 = vld [vmem:[#allocation7 + $0x40] sm:$0xff]
    %v265 = vld [vmem:[#allocation7 + $0x48] sm:$0xff]
    %v266 = vld [vmem:[#allocation7 + $0x50] sm:$0xff]
    %v267 = vld [vmem:[#allocation7 + $0x58] sm:$0xff]
    %v268 = vld [vmem:[#allocation7 + $0x60] sm:$0xff]
    %v269 = vld [vmem:[#allocation7 + $0x68] sm:$0xff]
    %v270 = vld [vmem:[#allocation7 + $0x70] sm:$0xff]
    %v271 = vld [vmem:[#allocation7 + $0x78] sm:$0xff]
    %v272 = vld [vmem:[#allocation7 + $0x80] sm:$0xff]
    %v273 = vld [vmem:[#allocation7 + $0x88] sm:$0xff]
    %v274 = vld [vmem:[#allocation7 + $0x90] sm:$0xff]
    %v275 = vld [vmem:[#allocation7 + $0x98] sm:$0xff]
    %v276 = vld [vmem:[#allocation7 + $0xa0] sm:$0xff]
    %v277 = vld [vmem:[#allocation7 + $0xa8] sm:$0xff]
    %v278 = vld [vmem:[#allocation7 + $0xb0] sm:$0xff]
    %v279 = vld [vmem:[#allocation7 + $0xb8] sm:$0xff]
    %v280 = vld [vmem:[#allocation7 + $0xc0] sm:$0xff]
    %v281 = vld [vmem:[#allocation7 + $0xc8] sm:$0xff]
    %v282 = vld [vmem:[#allocation7 + $0xd0] sm:$0xff]
    %v283 = vld [vmem:[#allocation7 + $0xd8] sm:$0xff]
    %v284 = vld [vmem:[#allocation7 + $0xe0] sm:$0xff]
    %v285 = vld [vmem:[#allocation7 + $0xe8] sm:$0xff]
    %v286 = vld [vmem:[#allocation7 + $0xf0] sm:$0xff]
    %v287 = vld [vmem:[#allocation7 + $0xf8] sm:$0xff]
    %v288 = vld [vmem:[#allocation7 + $0x100] sm:$0xff]
    %v289 = vld [vmem:[#allocation7 + $0x108] sm:$0xff]
    %v290 = vld [vmem:[#allocation7 + $0x110] sm:$0xff]
    %v291 = vld [vmem:[#allocation7 + $0x118] sm:$0xff]
    %v292 = vld [vmem:[#allocation7 + $0x120] sm:$0xff]
    %v293 = vld [vmem:[#allocation7 + $0x128] sm:$0xff]
    %v294 = vld [vmem:[#allocation7 + $0x130] sm:$0xff]
    %v295 = vld [vmem:[#allocation7 + $0x138] sm:$0xff]
    %v296 = vld [vmem:[#allocation7 + $0x140] sm:$0xff]
    %v297 = vld [vmem:[#allocation7 + $0x148] sm:$0xff]
    %v298 = vld [vmem:[#allocation7 + $0x150] sm:$0xff]
    %v299 = vld [vmem:[#allocation7 + $0x158] sm:$0xff]
    %v300 = vld [vmem:[#allocation7 + $0x160] sm:$0xff]
    %v301 = vld [vmem:[#allocation7 + $0x168] sm:$0xff]
    %v302 = vld [vmem:[#allocation7 + $0x170] sm:$0xff]
    %v303 = vld [vmem:[#allocation7 + $0x178] sm:$0xff]
    %v304 = vld [vmem:[#allocation7 + $0x180] sm:$0xff]
    %v305 = vld [vmem:[#allocation7 + $0x188] sm:$0xff]
    %v306 = vld [vmem:[#allocation7 + $0x190] sm:$0xff]
    %v307 = vld [vmem:[#allocation7 + $0x198] sm:$0xff]
    %v308 = vld [vmem:[#allocation7 + $0x1a0] sm:$0xff]
    %v309 = vld [vmem:[#allocation7 + $0x1a8] sm:$0xff]
    %v310 = vld [vmem:[#allocation7 + $0x1b0] sm:$0xff]
    %v311 = vld [vmem:[#allocation7 + $0x1b8] sm:$0xff]
    %v312 = vld [vmem:[#allocation7 + $0x1c0] sm:$0xff]
    %v313 = vld [vmem:[#allocation7 + $0x1c8] sm:$0xff]
    %v314 = vld [vmem:[#allocation7 + $0x1d0] sm:$0xff]
    %v315 = vld [vmem:[#allocation7 + $0x1d8] sm:$0xff]
    %v316 = vld [vmem:[#allocation7 + $0x1e0] sm:$0xff]
    %v317 = vld [vmem:[#allocation7 + $0x1e8] sm:$0xff]
    %v318 = vld [vmem:[#allocation7 + $0x1f0] sm:$0xff]
    %v319 = vld [vmem:[#allocation7 + $0x1f8] sm:$0xff]
    %v320 = vand.u32 %v271, 4294901760
    %321 = vmatpush.msra.mxu0 %v320
    %v322 = vand.u32 %v270, 4294901760
    %323 = vmatpush.msra.mxu0 %v322
    %v324 = vand.u32 %v269, 4294901760
    %325 = vmatpush.msra.mxu0 %v324
    %v326 = vand.u32 %v268, 4294901760
    %327 = vmatpush.msra.mxu0 %v326
    %v328 = vand.u32 %v267, 4294901760
    %329 = vmatpush.msra.mxu0 %v328
    %v330 = vand.u32 %v266, 4294901760
    %331 = vmatpush.msra.mxu0 %v330
    %v332 = vand.u32 %v265, 4294901760
    %333 = vmatpush.msra.mxu0 %v332
    %v334 = vand.u32 %v264, 4294901760
    %335 = vmatpush.msra.mxu0 %v334
    %v336 = vand.u32 %v263, 4294901760
    %337 = vmatpush.msra.mxu0 %v336
    %v338 = vand.u32 %v262, 4294901760
    %339 = vmatpush.msra.mxu0 %v338
    %v340 = vand.u32 %v261, 4294901760
    %341 = vmatpush.msra.mxu0 %v340
    %v342 = vand.u32 %v260, 4294901760
    %343 = vmatpush.msra.mxu0 %v342
    %v344 = vand.u32 %v259, 4294901760
    %345 = vmatpush.msra.mxu0 %v344
    %v346 = vand.u32 %v258, 4294901760
    %347 = vmatpush.msra.mxu0 %v346
    %v348 = vand.u32 %v257, 4294901760
    %349 = vmatpush.msra.mxu0 %v348
    %v350 = vand.u32 %v256, 4294901760
    %351 = vmatpush.msra.mxu0 %v350
    %v352 = vsub.f32 %v252, %v252
    %v353 = vand.u32 %v352, 4294901760
    %v354 = vsub.f32 %v352, %v353
    %v355 = vand.u32 %v354, 4294901760
    %356 = vmatmul.f32.gmra.mxu0 %v355
    %v357 = vpop.f32.mrf.mxu0
    %v358 = vadd.f32 0.0, %v357
    %359 = vdwg.mxu0
    %v360 = vand.u32 %v271, 4294901760
    %v361 = vsub.f32 %v271, %v360
    %v362 = vand.u32 %v361, 4294901760
    %v363 = vsub.f32 %v361, %v362
    %v364 = vand.u32 %v363, 4294901760
    %365 = vmatpush.msra.mxu0 %v364
    %v366 = vand.u32 %v270, 4294901760
    %v367 = vsub.f32 %v270, %v366
    %v368 = vand.u32 %v367, 4294901760
    %v369 = vsub.f32 %v367, %v368
    %v370 = vand.u32 %v369, 4294901760
    %371 = vmatpush.msra.mxu0 %v370
    %v372 = vand.u32 %v269, 4294901760
    %v373 = vsub.f32 %v269, %v372
    %v374 = vand.u32 %v373, 4294901760
    %v375 = vsub.f32 %v373, %v374
    %v376 = vand.u32 %v375, 4294901760
    %377 = vmatpush.msra.mxu0 %v376
    %v378 = vand.u32 %v268, 4294901760
    %v379 = vsub.f32 %v268, %v378
    %v380 = vand.u32 %v379, 4294901760
    %v381 = vsub.f32 %v379, %v380
    %v382 = vand.u32 %v381, 4294901760
    %383 = vmatpush.msra.mxu0 %v382
    %v384 = vand.u32 %v267, 4294901760
    %v385 = vsub.f32 %v267, %v384
    %v386 = vand.u32 %v385, 4294901760
    %v387 = vsub.f32 %v385, %v386
    %v388 = vand.u32 %v387, 4294901760
    %389 = vmatpush.msra.mxu0 %v388
    %v390 = vand.u32 %v266, 4294901760
    %v391 = vsub.f32 %v266, %v390
    %v392 = vand.u32 %v391, 4294901760
    %v393 = vsub.f32 %v391, %v392
    %v394 = vand.u32 %v393, 4294901760
    %395 = vmatpush.msra.mxu0 %v394
    %v396 = vand.u32 %v265, 4294901760
    %v397 = vsub.f32 %v265, %v396
    %v398 = vand.u32 %v397, 4294901760
    %v399 = vsub.f32 %v397, %v398
    %v400 = vand.u32 %v399, 4294901760
    %401 = vmatpush.msra.mxu0 %v400
    %v402 = vand.u32 %v264, 4294901760
    %v403 = vsub.f32 %v264, %v402
    %v404 = vand.u32 %v403, 4294901760
    %v405 = vsub.f32 %v403, %v404
    %v406 = vand.u32 %v405, 4294901760
    %407 = vmatpush.msra.mxu0 %v406
    %v408 = vand.u32 %v263, 4294901760
    %v409 = vsub.f32 %v263, %v408
    %v410 = vand.u32 %v409, 4294901760
    %v411 = vsub.f32 %v409, %v410
    %v412 = vand.u32 %v411, 4294901760
    %413 = vmatpush.msra.mxu0 %v412
    %v414 = vand.u32 %v262, 4294901760
    %v415 = vsub.f32 %v262, %v414
    %v416 = vand.u32 %v415, 4294901760
    %v417 = vsub.f32 %v415, %v416
    %v418 = vand.u32 %v417, 4294901760
    %419 = vmatpush.msra.mxu0 %v418
    %v420 = vand.u32 %v261, 4294901760
    %v421 = vsub.f32 %v261, %v420
    %v422 = vand.u32 %v421, 4294901760
    %v423 = vsub.f32 %v421, %v422
    %v424 = vand.u32 %v423, 4294901760
    %425 = vmatpush.msra.mxu0 %v424
    %v426 = vand.u32 %v260, 4294901760
    %v427 = vsub.f32 %v260, %v426
    %v428 = vand.u32 %v427, 4294901760
    %v429 = vsub.f32 %v427, %v428
    %v430 = vand.u32 %v429, 4294901760
    %431 = vmatpush.msra.mxu0 %v430
    %v432 = vand.u32 %v259, 4294901760
    %v433 = vsub.f32 %v259, %v432
    %v434 = vand.u32 %v433, 4294901760
    %v435 = vsub.f32 %v433, %v434
    %v436 = vand.u32 %v435, 4294901760
    %437 = vmatpush.msra.mxu0 %v436
    %v438 = vand.u32 %v258, 4294901760
    %v439 = vsub.f32 %v258, %v438
    %v440 = vand.u32 %v439, 4294901760
    %v441 = vsub.f32 %v439, %v440
    %v442 = vand.u32 %v441, 4294901760
    %443 = vmatpush.msra.mxu0 %v442
    %v444 = vand.u32 %v257, 4294901760
    %v445 = vsub.f32 %v257, %v444
    %v446 = vand.u32 %v445, 4294901760
    %v447 = vsub.f32 %v445, %v446
    %v448 = vand.u32 %v447, 4294901760
    %449 = vmatpush.msra.mxu0 %v448
    %v450 = vand.u32 %v256, 4294901760
    %v451 = vsub.f32 %v256, %v450
    %v452 = vand.u32 %v451, 4294901760
    %v453 = vsub.f32 %v451, %v452
    %v454 = vand.u32 %v453, 4294901760
    %455 = vmatpush.msra.mxu0 %v454
    %456 = vmatmul.f32.gmra.mxu0 %v252
    %v457 = vpop.f32.mrf.mxu0
    %v458 = vadd.f32 %v358, %v457
    %459 = vdwg.mxu0
    %v460 = vand.u32 %v271, 4294901760
    %v461 = vsub.f32 %v271, %v460
    %462 = vmatpush.msra.mxu0 %v461
    %v463 = vand.u32 %v270, 4294901760
    %v464 = vsub.f32 %v270, %v463
    %465 = vmatpush.msra.mxu0 %v464
    %v466 = vand.u32 %v269, 4294901760
    %v467 = vsub.f32 %v269, %v466
    %468 = vmatpush.msra.mxu0 %v467
    %v469 = vand.u32 %v268, 4294901760
    %v470 = vsub.f32 %v268, %v469
    %471 = vmatpush.msra.mxu0 %v470
    %v472 = vand.u32 %v267, 4294901760
    %v473 = vsub.f32 %v267, %v472
    %474 = vmatpush.msra.mxu0 %v473
    %v475 = vand.u32 %v266, 4294901760
    %v476 = vsub.f32 %v266, %v475
    %477 = vmatpush.msra.mxu0 %v476
    %v478 = vand.u32 %v265, 4294901760
    %v479 = vsub.f32 %v265, %v478
    %480 = vmatpush.msra.mxu0 %v479
    %v481 = vand.u32 %v264, 4294901760
    %v482 = vsub.f32 %v264, %v481
    %483 = vmatpush.msra.mxu0 %v482
    %v484 = vand.u32 %v263, 4294901760
    %v485 = vsub.f32 %v263, %v484
    %486 = vmatpush.msra.mxu0 %v485
    %v487 = vand.u32 %v262, 4294901760
    %v488 = vsub.f32 %v262, %v487
    %489 = vmatpush.msra.mxu0 %v488
    %v490 = vand.u32 %v261, 4294901760
    %v491 = vsub.f32 %v261, %v490
    %492 = vmatpush.msra.mxu0 %v491
    %v493 = vand.u32 %v260, 4294901760
    %v494 = vsub.f32 %v260, %v493
    %495 = vmatpush.msra.mxu0 %v494
    %v496 = vand.u32 %v259, 4294901760
    %v497 = vsub.f32 %v259, %v496
    %498 = vmatpush.msra.mxu0 %v497
    %v499 = vand.u32 %v258, 4294901760
    %v500 = vsub.f32 %v258, %v499
    %501 = vmatpush.msra.mxu0 %v500
    %v502 = vand.u32 %v257, 4294901760
    %v503 = vsub.f32 %v257, %v502
    %504 = vmatpush.msra.mxu0 %v503
    %v505 = vand.u32 %v256, 4294901760
    %v506 = vsub.f32 %v256, %v505
    %507 = vmatpush.msra.mxu0 %v506
    %v508 = vsub.f32 %v252, %v252
    %509 = vmatmul.f32.gmra.mxu0 %v508
    %v510 = vpop.f32.mrf.mxu0
    %v511 = vadd.f32 %v458, %v510
    %512 = vdwg.mxu0
    %v513 = vand.u32 %v271, 4294901760
    %514 = vmatpush.msra.mxu0 %v513
    %v515 = vand.u32 %v270, 4294901760
    %516 = vmatpush.msra.mxu0 %v515
    %v517 = vand.u32 %v269, 4294901760
    %518 = vmatpush.msra.mxu0 %v517
    %v519 = vand.u32 %v268, 4294901760
    %520 = vmatpush.msra.mxu0 %v519
    %v521 = vand.u32 %v267, 4294901760
    %522 = vmatpush.msra.mxu0 %v521
    %v523 = vand.u32 %v266, 4294901760
    %524 = vmatpush.msra.mxu0 %v523
    %v525 = vand.u32 %v265, 4294901760
    %526 = vmatpush.msra.mxu0 %v525
    %v527 = vand.u32 %v264, 4294901760
    %528 = vmatpush.msra.mxu0 %v527
    %v529 = vand.u32 %v263, 4294901760
    %530 = vmatpush.msra.mxu0 %v529
    %v531 = vand.u32 %v262, 4294901760
    %532 = vmatpush.msra.mxu0 %v531
    %v533 = vand.u32 %v261, 4294901760
    %534 = vmatpush.msra.mxu0 %v533
    %v535 = vand.u32 %v260, 4294901760
    %536 = vmatpush.msra.mxu0 %v535
    %v537 = vand.u32 %v259, 4294901760
    %538 = vmatpush.msra.mxu0 %v537
    %v539 = vand.u32 %v258, 4294901760
    %540 = vmatpush.msra.mxu0 %v539
    %v541 = vand.u32 %v257, 4294901760
    %542 = vmatpush.msra.mxu0 %v541
    %v543 = vand.u32 %v256, 4294901760
    %544 = vmatpush.msra.mxu0 %v543
    %v545 = vsub.f32 %v252, %v252
    %v546 = vand.u32 %v545, 4294901760
    %547 = vmatmul.f32.gmra.mxu0 %v546
    %v548 = vpop.f32.mrf.mxu0
    %v549 = vadd.f32 %v511, %v548
    %550 = vdwg.mxu0
    %v551 = vand.u32 %v271, 4294901760
    %v552 = vsub.f32 %v271, %v551
    %v553 = vand.u32 %v552, 4294901760
    %554 = vmatpush.msra.mxu0 %v553
    %v555 = vand.u32 %v270, 4294901760
    %v556 = vsub.f32 %v270, %v555
    %v557 = vand.u32 %v556, 4294901760
    %558 = vmatpush.msra.mxu0 %v557
    %v559 = vand.u32 %v269, 4294901760
    %v560 = vsub.f32 %v269, %v559
    %v561 = vand.u32 %v560, 4294901760
    %562 = vmatpush.msra.mxu0 %v561
    %v563 = vand.u32 %v268, 4294901760
    %v564 = vsub.f32 %v268, %v563
    %v565 = vand.u32 %v564, 4294901760
    %566 = vmatpush.msra.mxu0 %v565
    %v567 = vand.u32 %v267, 4294901760
    %v568 = vsub.f32 %v267, %v567
    %v569 = vand.u32 %v568, 4294901760
    %570 = vmatpush.msra.mxu0 %v569
    %v571 = vand.u32 %v266, 4294901760
    %v572 = vsub.f32 %v266, %v571
    %v573 = vand.u32 %v572, 4294901760
    %574 = vmatpush.msra.mxu0 %v573
    %v575 = vand.u32 %v265, 4294901760
    %v576 = vsub.f32 %v265, %v575
    %v577 = vand.u32 %v576, 4294901760
    %578 = vmatpush.msra.mxu0 %v577
    %v579 = vand.u32 %v264, 4294901760
    %v580 = vsub.f32 %v264, %v579
    %v581 = vand.u32 %v580, 4294901760
    %582 = vmatpush.msra.mxu0 %v581
    %v583 = vand.u32 %v263, 4294901760
    %v584 = vsub.f32 %v263, %v583
    %v585 = vand.u32 %v584, 4294901760
    %586 = vmatpush.msra.mxu0 %v585
    %v587 = vand.u32 %v262, 4294901760
    %v588 = vsub.f32 %v262, %v587
    %v589 = vand.u32 %v588, 4294901760
    %590 = vmatpush.msra.mxu0 %v589
    %v591 = vand.u32 %v261, 4294901760
    %v592 = vsub.f32 %v261, %v591
    %v593 = vand.u32 %v592, 4294901760
    %594 = vmatpush.msra.mxu0 %v593
    %v595 = vand.u32 %v260, 4294901760
    %v596 = vsub.f32 %v260, %v595
    %v597 = vand.u32 %v596, 4294901760
    %598 = vmatpush.msra.mxu0 %v597
    %v599 = vand.u32 %v259, 4294901760
    %v600 = vsub.f32 %v259, %v599
    %v601 = vand.u32 %v600, 4294901760
    %602 = vmatpush.msra.mxu0 %v601
    %v603 = vand.u32 %v258, 4294901760
    %v604 = vsub.f32 %v258, %v603
    %v605 = vand.u32 %v604, 4294901760
    %606 = vmatpush.msra.mxu0 %v605
    %v607 = vand.u32 %v257, 4294901760
    %v608 = vsub.f32 %v257, %v607
    %v609 = vand.u32 %v608, 4294901760
    %610 = vmatpush.msra.mxu0 %v609
    %v611 = vand.u32 %v256, 4294901760
    %v612 = vsub.f32 %v256, %v611
    %v613 = vand.u32 %v612, 4294901760
    %614 = vmatpush.msra.mxu0 %v613
    %615 = vmatmul.f32.gmra.mxu0 %v252
    %v616 = vpop.f32.mrf.mxu0
    %v617 = vadd.f32 %v549, %v616
    %618 = vdwg.mxu0
    %v619 = vand.u32 %v271, 4294901760
    %620 = vmatpush.msra.mxu0 %v619
    %v621 = vand.u32 %v270, 4294901760
    %622 = vmatpush.msra.mxu0 %v621
    %v623 = vand.u32 %v269, 4294901760
    %624 = vmatpush.msra.mxu0 %v623
    %v625 = vand.u32 %v268, 4294901760
    %626 = vmatpush.msra.mxu0 %v625
    %v627 = vand.u32 %v267, 4294901760
    %628 = vmatpush.msra.mxu0 %v627
    %v629 = vand.u32 %v266, 4294901760
    %630 = vmatpush.msra.mxu0 %v629
    %v631 = vand.u32 %v265, 4294901760
    %632 = vmatpush.msra.mxu0 %v631
    %v633 = vand.u32 %v264, 4294901760
    %634 = vmatpush.msra.mxu0 %v633
    %v635 = vand.u32 %v263, 4294901760
    %636 = vmatpush.msra.mxu0 %v635
    %v637 = vand.u32 %v262, 4294901760
    %638 = vmatpush.msra.mxu0 %v637
    %v639 = vand.u32 %v261, 4294901760
    %640 = vmatpush.msra.mxu0 %v639
    %v641 = vand.u32 %v260, 4294901760
    %642 = vmatpush.msra.mxu0 %v641
    %v643 = vand.u32 %v259, 4294901760
    %644 = vmatpush.msra.mxu0 %v643
    %v645 = vand.u32 %v258, 4294901760
    %646 = vmatpush.msra.mxu0 %v645
    %v647 = vand.u32 %v257, 4294901760
    %648 = vmatpush.msra.mxu0 %v647
    %v649 = vand.u32 %v256, 4294901760
    %650 = vmatpush.msra.mxu0 %v649
    %651 = vmatmul.f32.gmra.mxu0 %v252
    %v652 = vpop.f32.mrf.mxu0
    %v653 = vadd.f32 %v617, %v652
    %654 = vdwg.mxu0
    %v655 = vand.u32 %v287, 4294901760
    %656 = vmatpush.msra.mxu0 %v655
    %v657 = vand.u32 %v286, 4294901760
    %658 = vmatpush.msra.mxu0 %v657
    %v659 = vand.u32 %v285, 4294901760
    %660 = vmatpush.msra.mxu0 %v659
    %v661 = vand.u32 %v284, 4294901760
    %662 = vmatpush.msra.mxu0 %v661
    %v663 = vand.u32 %v283, 4294901760
    %664 = vmatpush.msra.mxu0 %v663
    %v665 = vand.u32 %v282, 4294901760
    %666 = vmatpush.msra.mxu0 %v665
    %v667 = vand.u32 %v281, 4294901760
    %668 = vmatpush.msra.mxu0 %v667
    %v669 = vand.u32 %v280, 4294901760
    %670 = vmatpush.msra.mxu0 %v669
    %v671 = vand.u32 %v279, 4294901760
    %672 = vmatpush.msra.mxu0 %v671
    %v673 = vand.u32 %v278, 4294901760
    %674 = vmatpush.msra.mxu0 %v673
    %v675 = vand.u32 %v277, 4294901760
    %676 = vmatpush.msra.mxu0 %v675
    %v677 = vand.u32 %v276, 4294901760
    %678 = vmatpush.msra.mxu0 %v677
    %v679 = vand.u32 %v275, 4294901760
    %680 = vmatpush.msra.mxu0 %v679
    %v681 = vand.u32 %v274, 4294901760
    %682 = vmatpush.msra.mxu0 %v681
    %v683 = vand.u32 %v273, 4294901760
    %684 = vmatpush.msra.mxu0 %v683
    %v685 = vand.u32 %v272, 4294901760
    %686 = vmatpush.msra.mxu0 %v685
    %v687 = vsub.f32 %v253, %v253
    %v688 = vand.u32 %v687, 4294901760
    %v689 = vsub.f32 %v687, %v688
    %v690 = vand.u32 %v689, 4294901760
    %691 = vmatmul.f32.gmra.mxu0 %v690
    %v692 = vpop.f32.mrf.mxu0
    %v693 = vadd.f32 %v653, %v692
    %694 = vdwg.mxu0
    %v695 = vand.u32 %v287, 4294901760
    %v696 = vsub.f32 %v287, %v695
    %v697 = vand.u32 %v696, 4294901760
    %v698 = vsub.f32 %v696, %v697
    %v699 = vand.u32 %v698, 4294901760
    %700 = vmatpush.msra.mxu0 %v699
    %v701 = vand.u32 %v286, 4294901760
    %v702 = vsub.f32 %v286, %v701
    %v703 = vand.u32 %v702, 4294901760
    %v704 = vsub.f32 %v702, %v703
    %v705 = vand.u32 %v704, 4294901760
    %706 = vmatpush.msra.mxu0 %v705
    %v707 = vand.u32 %v285, 4294901760
    %v708 = vsub.f32 %v285, %v707
    %v709 = vand.u32 %v708, 4294901760
    %v710 = vsub.f32 %v708, %v709
    %v711 = vand.u32 %v710, 4294901760
    %712 = vmatpush.msra.mxu0 %v711
    %v713 = vand.u32 %v284, 4294901760
    %v714 = vsub.f32 %v284, %v713
    %v715 = vand.u32 %v714, 4294901760
    %v716 = vsub.f32 %v714, %v715
    %v717 = vand.u32 %v716, 4294901760
    %718 = vmatpush.msra.mxu0 %v717
    %v719 = vand.u32 %v283, 4294901760
    %v720 = vsub.f32 %v283, %v719
    %v721 = vand.u32 %v720, 4294901760
    %v722 = vsub.f32 %v720, %v721
    %v723 = vand.u32 %v722, 4294901760
    %724 = vmatpush.msra.mxu0 %v723
    %v725 = vand.u32 %v282, 4294901760
    %v726 = vsub.f32 %v282, %v725
    %v727 = vand.u32 %v726, 4294901760
    %v728 = vsub.f32 %v726, %v727
    %v729 = vand.u32 %v728, 4294901760
    %730 = vmatpush.msra.mxu0 %v729
    %v731 = vand.u32 %v281, 4294901760
    %v732 = vsub.f32 %v281, %v731
    %v733 = vand.u32 %v732, 4294901760
    %v734 = vsub.f32 %v732, %v733
    %v735 = vand.u32 %v734, 4294901760
    %736 = vmatpush.msra.mxu0 %v735
    %v737 = vand.u32 %v280, 4294901760
    %v738 = vsub.f32 %v280, %v737
    %v739 = vand.u32 %v738, 4294901760
    %v740 = vsub.f32 %v738, %v739
    %v741 = vand.u32 %v740, 4294901760
    %742 = vmatpush.msra.mxu0 %v741
    %v743 = vand.u32 %v279, 4294901760
    %v744 = vsub.f32 %v279, %v743
    %v745 = vand.u32 %v744, 4294901760
    %v746 = vsub.f32 %v744, %v745
    %v747 = vand.u32 %v746, 4294901760
    %748 = vmatpush.msra.mxu0 %v747
    %v749 = vand.u32 %v278, 4294901760
    %v750 = vsub.f32 %v278, %v749
    %v751 = vand.u32 %v750, 4294901760
    %v752 = vsub.f32 %v750, %v751
    %v753 = vand.u32 %v752, 4294901760
    %754 = vmatpush.msra.mxu0 %v753
    %v755 = vand.u32 %v277, 4294901760
    %v756 = vsub.f32 %v277, %v755
    %v757 = vand.u32 %v756, 4294901760
    %v758 = vsub.f32 %v756, %v757
    %v759 = vand.u32 %v758, 4294901760
    %760 = vmatpush.msra.mxu0 %v759
    %v761 = vand.u32 %v276, 4294901760
    %v762 = vsub.f32 %v276, %v761
    %v763 = vand.u32 %v762, 4294901760
    %v764 = vsub.f32 %v762, %v763
    %v765 = vand.u32 %v764, 4294901760
    %766 = vmatpush.msra.mxu0 %v765
    %v767 = vand.u32 %v275, 4294901760
    %v768 = vsub.f32 %v275, %v767
    %v769 = vand.u32 %v768, 4294901760
    %v770 = vsub.f32 %v768, %v769
    %v771 = vand.u32 %v770, 4294901760
    %772 = vmatpush.msra.mxu0 %v771
    %v773 = vand.u32 %v274, 4294901760
    %v774 = vsub.f32 %v274, %v773
    %v775 = vand.u32 %v774, 4294901760
    %v776 = vsub.f32 %v774, %v775
    %v777 = vand.u32 %v776, 4294901760
    %778 = vmatpush.msra.mxu0 %v777
    %v779 = vand.u32 %v273, 4294901760
    %v780 = vsub.f32 %v273, %v779
    %v781 = vand.u32 %v780, 4294901760
    %v782 = vsub.f32 %v780, %v781
    %v783 = vand.u32 %v782, 4294901760
    %784 = vmatpush.msra.mxu0 %v783
    %v785 = vand.u32 %v272, 4294901760
    %v786 = vsub.f32 %v272, %v785
    %v787 = vand.u32 %v786, 4294901760
    %v788 = vsub.f32 %v786, %v787
    %v789 = vand.u32 %v788, 4294901760
    %790 = vmatpush.msra.mxu0 %v789
    %791 = vmatmul.f32.gmra.mxu0 %v253
    %v792 = vpop.f32.mrf.mxu0
    %v793 = vadd.f32 %v693, %v792
    %794 = vdwg.mxu0
    %v795 = vand.u32 %v287, 4294901760
    %v796 = vsub.f32 %v287, %v795
    %797 = vmatpush.msra.mxu0 %v796
    %v798 = vand.u32 %v286, 4294901760
    %v799 = vsub.f32 %v286, %v798
    %800 = vmatpush.msra.mxu0 %v799
    %v801 = vand.u32 %v285, 4294901760
    %v802 = vsub.f32 %v285, %v801
    %803 = vmatpush.msra.mxu0 %v802
    %v804 = vand.u32 %v284, 4294901760
    %v805 = vsub.f32 %v284, %v804
    %806 = vmatpush.msra.mxu0 %v805
    %v807 = vand.u32 %v283, 4294901760
    %v808 = vsub.f32 %v283, %v807
    %809 = vmatpush.msra.mxu0 %v808
    %v810 = vand.u32 %v282, 4294901760
    %v811 = vsub.f32 %v282, %v810
    %812 = vmatpush.msra.mxu0 %v811
    %v813 = vand.u32 %v281, 4294901760
    %v814 = vsub.f32 %v281, %v813
    %815 = vmatpush.msra.mxu0 %v814
    %v816 = vand.u32 %v280, 4294901760
    %v817 = vsub.f32 %v280, %v816
    %818 = vmatpush.msra.mxu0 %v817
    %v819 = vand.u32 %v279, 4294901760
    %v820 = vsub.f32 %v279, %v819
    %821 = vmatpush.msra.mxu0 %v820
    %v822 = vand.u32 %v278, 4294901760
    %v823 = vsub.f32 %v278, %v822
    %824 = vmatpush.msra.mxu0 %v823
    %v825 = vand.u32 %v277, 4294901760
    %v826 = vsub.f32 %v277, %v825
    %827 = vmatpush.msra.mxu0 %v826
    %v828 = vand.u32 %v276, 4294901760
    %v829 = vsub.f32 %v276, %v828
    %830 = vmatpush.msra.mxu0 %v829
    %v831 = vand.u32 %v275, 4294901760
    %v832 = vsub.f32 %v275, %v831
    %833 = vmatpush.msra.mxu0 %v832
    %v834 = vand.u32 %v274, 4294901760
    %v835 = vsub.f32 %v274, %v834
    %836 = vmatpush.msra.mxu0 %v835
    %v837 = vand.u32 %v273, 4294901760
    %v838 = vsub.f32 %v273, %v837
    %839 = vmatpush.msra.mxu0 %v838
    %v840 = vand.u32 %v272, 4294901760
    %v841 = vsub.f32 %v272, %v840
    %842 = vmatpush.msra.mxu0 %v841
    %v843 = vsub.f32 %v253, %v253
    %844 = vmatmul.f32.gmra.mxu0 %v843
    %v845 = vpop.f32.mrf.mxu0
    %v846 = vadd.f32 %v793, %v845
    %847 = vdwg.mxu0
    %v848 = vand.u32 %v287, 4294901760
    %849 = vmatpush.msra.mxu0 %v848
    %v850 = vand.u32 %v286, 4294901760
    %851 = vmatpush.msra.mxu0 %v850
    %v852 = vand.u32 %v285, 4294901760
    %853 = vmatpush.msra.mxu0 %v852
    %v854 = vand.u32 %v284, 4294901760
    %855 = vmatpush.msra.mxu0 %v854
    %v856 = vand.u32 %v283, 4294901760
    %857 = vmatpush.msra.mxu0 %v856
    %v858 = vand.u32 %v282, 4294901760
    %859 = vmatpush.msra.mxu0 %v858
    %v860 = vand.u32 %v281, 4294901760
    %861 = vmatpush.msra.mxu0 %v860
    %v862 = vand.u32 %v280, 4294901760
    %863 = vmatpush.msra.mxu0 %v862
    %v864 = vand.u32 %v279, 4294901760
    %865 = vmatpush.msra.mxu0 %v864
    %v866 = vand.u32 %v278, 4294901760
    %867 = vmatpush.msra.mxu0 %v866
    %v868 = vand.u32 %v277, 4294901760
    %869 = vmatpush.msra.mxu0 %v868
    %v870 = vand.u32 %v276, 4294901760
    %871 = vmatpush.msra.mxu0 %v870
    %v872 = vand.u32 %v275, 4294901760
    %873 = vmatpush.msra.mxu0 %v872
    %v874 = vand.u32 %v274, 4294901760
    %875 = vmatpush.msra.mxu0 %v874
    %v876 = vand.u32 %v273, 4294901760
    %877 = vmatpush.msra.mxu0 %v876
    %v878 = vand.u32 %v272, 4294901760
    %879 = vmatpush.msra.mxu0 %v878
    %v880 = vsub.f32 %v253, %v253
    %v881 = vand.u32 %v880, 4294901760
    %882 = vmatmul.f32.gmra.mxu0 %v881
    %v883 = vpop.f32.mrf.mxu0
    %v884 = vadd.f32 %v846, %v883
    %885 = vdwg.mxu0
    %v886 = vand.u32 %v287, 4294901760
    %v887 = vsub.f32 %v287, %v886
    %v888 = vand.u32 %v887, 4294901760
    %889 = vmatpush.msra.mxu0 %v888
    %v890 = vand.u32 %v286, 4294901760
    %v891 = vsub.f32 %v286, %v890
    %v892 = vand.u32 %v891, 4294901760
    %893 = vmatpush.msra.mxu0 %v892
    %v894 = vand.u32 %v285, 4294901760
    %v895 = vsub.f32 %v285, %v894
    %v896 = vand.u32 %v895, 4294901760
    %897 = vmatpush.msra.mxu0 %v896
    %v898 = vand.u32 %v284, 4294901760
    %v899 = vsub.f32 %v284, %v898
    %v900 = vand.u32 %v899, 4294901760
    %901 = vmatpush.msra.mxu0 %v900
    %v902 = vand.u32 %v283, 4294901760
    %v903 = vsub.f32 %v283, %v902
    %v904 = vand.u32 %v903, 4294901760
    %905 = vmatpush.msra.mxu0 %v904
    %v906 = vand.u32 %v282, 4294901760
    %v907 = vsub.f32 %v282, %v906
    %v908 = vand.u32 %v907, 4294901760
    %909 = vmatpush.msra.mxu0 %v908
    %v910 = vand.u32 %v281, 4294901760
    %v911 = vsub.f32 %v281, %v910
    %v912 = vand.u32 %v911, 4294901760
    %913 = vmatpush.msra.mxu0 %v912
    %v914 = vand.u32 %v280, 4294901760
    %v915 = vsub.f32 %v280, %v914
    %v916 = vand.u32 %v915, 4294901760
    %917 = vmatpush.msra.mxu0 %v916
    %v918 = vand.u32 %v279, 4294901760
    %v919 = vsub.f32 %v279, %v918
    %v920 = vand.u32 %v919, 4294901760
    %921 = vmatpush.msra.mxu0 %v920
    %v922 = vand.u32 %v278, 4294901760
    %v923 = vsub.f32 %v278, %v922
    %v924 = vand.u32 %v923, 4294901760
    %925 = vmatpush.msra.mxu0 %v924
    %v926 = vand.u32 %v277, 4294901760
    %v927 = vsub.f32 %v277, %v926
    %v928 = vand.u32 %v927, 4294901760
    %929 = vmatpush.msra.mxu0 %v928
    %v930 = vand.u32 %v276, 4294901760
    %v931 = vsub.f32 %v276, %v930
    %v932 = vand.u32 %v931, 4294901760
    %933 = vmatpush.msra.mxu0 %v932
    %v934 = vand.u32 %v275, 4294901760
    %v935 = vsub.f32 %v275, %v934
    %v936 = vand.u32 %v935, 4294901760
    %937 = vmatpush.msra.mxu0 %v936
    %v938 = vand.u32 %v274, 4294901760
    %v939 = vsub.f32 %v274, %v938
    %v940 = vand.u32 %v939, 4294901760
    %941 = vmatpush.msra.mxu0 %v940
    %v942 = vand.u32 %v273, 4294901760
    %v943 = vsub.f32 %v273, %v942
    %v944 = vand.u32 %v943, 4294901760
    %945 = vmatpush.msra.mxu0 %v944
    %v946 = vand.u32 %v272, 4294901760
    %v947 = vsub.f32 %v272, %v946
    %v948 = vand.u32 %v947, 4294901760
    %949 = vmatpush.msra.mxu0 %v948
    %950 = vmatmul.f32.gmra.mxu0 %v253
    %v951 = vpop.f32.mrf.mxu0
    %v952 = vadd.f32 %v884, %v951
    %953 = vdwg.mxu0
    %v954 = vand.u32 %v287, 4294901760
    %955 = vmatpush.msra.mxu0 %v954
    %v956 = vand.u32 %v286, 4294901760
    %957 = vmatpush.msra.mxu0 %v956
    %v958 = vand.u32 %v285, 4294901760
    %959 = vmatpush.msra.mxu0 %v958
    %v960 = vand.u32 %v284, 4294901760
    %961 = vmatpush.msra.mxu0 %v960
    %v962 = vand.u32 %v283, 4294901760
    %963 = vmatpush.msra.mxu0 %v962
    %v964 = vand.u32 %v282, 4294901760
    %965 = vmatpush.msra.mxu0 %v964
    %v966 = vand.u32 %v281, 4294901760
    %967 = vmatpush.msra.mxu0 %v966
    %v968 = vand.u32 %v280, 4294901760
    %969 = vmatpush.msra.mxu0 %v968
    %v970 = vand.u32 %v279, 4294901760
    %971 = vmatpush.msra.mxu0 %v970
    %v972 = vand.u32 %v278, 4294901760
    %973 = vmatpush.msra.mxu0 %v972
    %v974 = vand.u32 %v277, 4294901760
    %975 = vmatpush.msra.mxu0 %v974
    %v976 = vand.u32 %v276, 4294901760
    %977 = vmatpush.msra.mxu0 %v976
    %v978 = vand.u32 %v275, 4294901760
    %979 = vmatpush.msra.mxu0 %v978
    %v980 = vand.u32 %v274, 4294901760
    %981 = vmatpush.msra.mxu0 %v980
    %v982 = vand.u32 %v273, 4294901760
    %983 = vmatpush.msra.mxu0 %v982
    %v984 = vand.u32 %v272, 4294901760
    %985 = vmatpush.msra.mxu0 %v984
    %986 = vmatmul.f32.gmra.mxu0 %v253
    %v987 = vpop.f32.mrf.mxu0
    %v988 = vadd.f32 %v952, %v987
    %989 = vdwg.mxu0
    %v990 = vand.u32 %v303, 4294901760
    %991 = vmatpush.msra.mxu0 %v990
    %v992 = vand.u32 %v302, 4294901760
    %993 = vmatpush.msra.mxu0 %v992
    %v994 = vand.u32 %v301, 4294901760
    %995 = vmatpush.msra.mxu0 %v994
    %v996 = vand.u32 %v300, 4294901760
    %997 = vmatpush.msra.mxu0 %v996
    %v998 = vand.u32 %v299, 4294901760
    %999 = vmatpush.msra.mxu0 %v998
    %v1000 = vand.u32 %v298, 4294901760
    %1001 = vmatpush.msra.mxu0 %v1000
    %v1002 = vand.u32 %v297, 4294901760
    %1003 = vmatpush.msra.mxu0 %v1002
    %v1004 = vand.u32 %v296, 4294901760
    %1005 = vmatpush.msra.mxu0 %v1004
    %v1006 = vand.u32 %v295, 4294901760
    %1007 = vmatpush.msra.mxu0 %v1006
    %v1008 = vand.u32 %v294, 4294901760
    %1009 = vmatpush.msra.mxu0 %v1008
    %v1010 = vand.u32 %v293, 4294901760
    %1011 = vmatpush.msra.mxu0 %v1010
    %v1012 = vand.u32 %v292, 4294901760
    %1013 = vmatpush.msra.mxu0 %v1012
    %v1014 = vand.u32 %v291, 4294901760
    %1015 = vmatpush.msra.mxu0 %v1014
    %v1016 = vand.u32 %v290, 4294901760
    %1017 = vmatpush.msra.mxu0 %v1016
    %v1018 = vand.u32 %v289, 4294901760
    %1019 = vmatpush.msra.mxu0 %v1018
    %v1020 = vand.u32 %v288, 4294901760
    %1021 = vmatpush.msra.mxu0 %v1020
    %v1022 = vsub.f32 %v254, %v254
    %v1023 = vand.u32 %v1022, 4294901760
    %v1024 = vsub.f32 %v1022, %v1023
    %v1025 = vand.u32 %v1024, 4294901760
    %1026 = vmatmul.f32.gmra.mxu0 %v1025
    %v1027 = vpop.f32.mrf.mxu0
    %v1028 = vadd.f32 %v988, %v1027
    %1029 = vdwg.mxu0
    %v1030 = vand.u32 %v303, 4294901760
    %v1031 = vsub.f32 %v303, %v1030
    %v1032 = vand.u32 %v1031, 4294901760
    %v1033 = vsub.f32 %v1031, %v1032
    %v1034 = vand.u32 %v1033, 4294901760
    %1035 = vmatpush.msra.mxu0 %v1034
    %v1036 = vand.u32 %v302, 4294901760
    %v1037 = vsub.f32 %v302, %v1036
    %v1038 = vand.u32 %v1037, 4294901760
    %v1039 = vsub.f32 %v1037, %v1038
    %v1040 = vand.u32 %v1039, 4294901760
    %1041 = vmatpush.msra.mxu0 %v1040
    %v1042 = vand.u32 %v301, 4294901760
    %v1043 = vsub.f32 %v301, %v1042
    %v1044 = vand.u32 %v1043, 4294901760
    %v1045 = vsub.f32 %v1043, %v1044
    %v1046 = vand.u32 %v1045, 4294901760
    %1047 = vmatpush.msra.mxu0 %v1046
    %v1048 = vand.u32 %v300, 4294901760
    %v1049 = vsub.f32 %v300, %v1048
    %v1050 = vand.u32 %v1049, 4294901760
    %v1051 = vsub.f32 %v1049, %v1050
    %v1052 = vand.u32 %v1051, 4294901760
    %1053 = vmatpush.msra.mxu0 %v1052
    %v1054 = vand.u32 %v299, 4294901760
    %v1055 = vsub.f32 %v299, %v1054
    %v1056 = vand.u32 %v1055, 4294901760
    %v1057 = vsub.f32 %v1055, %v1056
    %v1058 = vand.u32 %v1057, 4294901760
    %1059 = vmatpush.msra.mxu0 %v1058
    %v1060 = vand.u32 %v298, 4294901760
    %v1061 = vsub.f32 %v298, %v1060
    %v1062 = vand.u32 %v1061, 4294901760
    %v1063 = vsub.f32 %v1061, %v1062
    %v1064 = vand.u32 %v1063, 4294901760
    %1065 = vmatpush.msra.mxu0 %v1064
    %v1066 = vand.u32 %v297, 4294901760
    %v1067 = vsub.f32 %v297, %v1066
    %v1068 = vand.u32 %v1067, 4294901760
    %v1069 = vsub.f32 %v1067, %v1068
    %v1070 = vand.u32 %v1069, 4294901760
    %1071 = vmatpush.msra.mxu0 %v1070
    %v1072 = vand.u32 %v296, 4294901760
    %v1073 = vsub.f32 %v296, %v1072
    %v1074 = vand.u32 %v1073, 4294901760
    %v1075 = vsub.f32 %v1073, %v1074
    %v1076 = vand.u32 %v1075, 4294901760
    %1077 = vmatpush.msra.mxu0 %v1076
    %v1078 = vand.u32 %v295, 4294901760
    %v1079 = vsub.f32 %v295, %v1078
    %v1080 = vand.u32 %v1079, 4294901760
    %v1081 = vsub.f32 %v1079, %v1080
    %v1082 = vand.u32 %v1081, 4294901760
    %1083 = vmatpush.msra.mxu0 %v1082
    %v1084 = vand.u32 %v294, 4294901760
    %v1085 = vsub.f32 %v294, %v1084
    %v1086 = vand.u32 %v1085, 4294901760
    %v1087 = vsub.f32 %v1085, %v1086
    %v1088 = vand.u32 %v1087, 4294901760
    %1089 = vmatpush.msra.mxu0 %v1088
    %v1090 = vand.u32 %v293, 4294901760
    %v1091 = vsub.f32 %v293, %v1090
    %v1092 = vand.u32 %v1091, 4294901760
    %v1093 = vsub.f32 %v1091, %v1092
    %v1094 = vand.u32 %v1093, 4294901760
    %1095 = vmatpush.msra.mxu0 %v1094
    %v1096 = vand.u32 %v292, 4294901760
    %v1097 = vsub.f32 %v292, %v1096
    %v1098 = vand.u32 %v1097, 4294901760
    %v1099 = vsub.f32 %v1097, %v1098
    %v1100 = vand.u32 %v1099, 4294901760
    %1101 = vmatpush.msra.mxu0 %v1100
    %v1102 = vand.u32 %v291, 4294901760
    %v1103 = vsub.f32 %v291, %v1102
    %v1104 = vand.u32 %v1103, 4294901760
    %v1105 = vsub.f32 %v1103, %v1104
    %v1106 = vand.u32 %v1105, 4294901760
    %1107 = vmatpush.msra.mxu0 %v1106
    %v1108 = vand.u32 %v290, 4294901760
    %v1109 = vsub.f32 %v290, %v1108
    %v1110 = vand.u32 %v1109, 4294901760
    %v1111 = vsub.f32 %v1109, %v1110
    %v1112 = vand.u32 %v1111, 4294901760
    %1113 = vmatpush.msra.mxu0 %v1112
    %v1114 = vand.u32 %v289, 4294901760
    %v1115 = vsub.f32 %v289, %v1114
    %v1116 = vand.u32 %v1115, 4294901760
    %v1117 = vsub.f32 %v1115, %v1116
    %v1118 = vand.u32 %v1117, 4294901760
    %1119 = vmatpush.msra.mxu0 %v1118
    %v1120 = vand.u32 %v288, 4294901760
    %v1121 = vsub.f32 %v288, %v1120
    %v1122 = vand.u32 %v1121, 4294901760
    %v1123 = vsub.f32 %v1121, %v1122
    %v1124 = vand.u32 %v1123, 4294901760
    %1125 = vmatpush.msra.mxu0 %v1124
    %1126 = vmatmul.f32.gmra.mxu0 %v254
    %v1127 = vpop.f32.mrf.mxu0
    %v1128 = vadd.f32 %v1028, %v1127
    %1129 = vdwg.mxu0
    %v1130 = vand.u32 %v303, 4294901760
    %v1131 = vsub.f32 %v303, %v1130
    %1132 = vmatpush.msra.mxu0 %v1131
    %v1133 = vand.u32 %v302, 4294901760
    %v1134 = vsub.f32 %v302, %v1133
    %1135 = vmatpush.msra.mxu0 %v1134
    %v1136 = vand.u32 %v301, 4294901760
    %v1137 = vsub.f32 %v301, %v1136
    %1138 = vmatpush.msra.mxu0 %v1137
    %v1139 = vand.u32 %v300, 4294901760
    %v1140 = vsub.f32 %v300, %v1139
    %1141 = vmatpush.msra.mxu0 %v1140
    %v1142 = vand.u32 %v299, 4294901760
    %v1143 = vsub.f32 %v299, %v1142
    %1144 = vmatpush.msra.mxu0 %v1143
    %v1145 = vand.u32 %v298, 4294901760
    %v1146 = vsub.f32 %v298, %v1145
    %1147 = vmatpush.msra.mxu0 %v1146
    %v1148 = vand.u32 %v297, 4294901760
    %v1149 = vsub.f32 %v297, %v1148
    %1150 = vmatpush.msra.mxu0 %v1149
    %v1151 = vand.u32 %v296, 4294901760
    %v1152 = vsub.f32 %v296, %v1151
    %1153 = vmatpush.msra.mxu0 %v1152
    %v1154 = vand.u32 %v295, 4294901760
    %v1155 = vsub.f32 %v295, %v1154
    %1156 = vmatpush.msra.mxu0 %v1155
    %v1157 = vand.u32 %v294, 4294901760
    %v1158 = vsub.f32 %v294, %v1157
    %1159 = vmatpush.msra.mxu0 %v1158
    %v1160 = vand.u32 %v293, 4294901760
    %v1161 = vsub.f32 %v293, %v1160
    %1162 = vmatpush.msra.mxu0 %v1161
    %v1163 = vand.u32 %v292, 4294901760
    %v1164 = vsub.f32 %v292, %v1163
    %1165 = vmatpush.msra.mxu0 %v1164
    %v1166 = vand.u32 %v291, 4294901760
    %v1167 = vsub.f32 %v291, %v1166
    %1168 = vmatpush.msra.mxu0 %v1167
    %v1169 = vand.u32 %v290, 4294901760
    %v1170 = vsub.f32 %v290, %v1169
    %1171 = vmatpush.msra.mxu0 %v1170
    %v1172 = vand.u32 %v289, 4294901760
    %v1173 = vsub.f32 %v289, %v1172
    %1174 = vmatpush.msra.mxu0 %v1173
    %v1175 = vand.u32 %v288, 4294901760
    %v1176 = vsub.f32 %v288, %v1175
    %1177 = vmatpush.msra.mxu0 %v1176
    %v1178 = vsub.f32 %v254, %v254
    %1179 = vmatmul.f32.gmra.mxu0 %v1178
    %v1180 = vpop.f32.mrf.mxu0
    %v1181 = vadd.f32 %v1128, %v1180
    %1182 = vdwg.mxu0
    %v1183 = vand.u32 %v303, 4294901760
    %1184 = vmatpush.msra.mxu0 %v1183
    %v1185 = vand.u32 %v302, 4294901760
    %1186 = vmatpush.msra.mxu0 %v1185
    %v1187 = vand.u32 %v301, 4294901760
    %1188 = vmatpush.msra.mxu0 %v1187
    %v1189 = vand.u32 %v300, 4294901760
    %1190 = vmatpush.msra.mxu0 %v1189
    %v1191 = vand.u32 %v299, 4294901760
    %1192 = vmatpush.msra.mxu0 %v1191
    %v1193 = vand.u32 %v298, 4294901760
    %1194 = vmatpush.msra.mxu0 %v1193
    %v1195 = vand.u32 %v297, 4294901760
    %1196 = vmatpush.msra.mxu0 %v1195
    %v1197 = vand.u32 %v296, 4294901760
    %1198 = vmatpush.msra.mxu0 %v1197
    %v1199 = vand.u32 %v295, 4294901760
    %1200 = vmatpush.msra.mxu0 %v1199
    %v1201 = vand.u32 %v294, 4294901760
    %1202 = vmatpush.msra.mxu0 %v1201
    %v1203 = vand.u32 %v293, 4294901760
    %1204 = vmatpush.msra.mxu0 %v1203
    %v1205 = vand.u32 %v292, 4294901760
    %1206 = vmatpush.msra.mxu0 %v1205
    %v1207 = vand.u32 %v291, 4294901760
    %1208 = vmatpush.msra.mxu0 %v1207
    %v1209 = vand.u32 %v290, 4294901760
    %1210 = vmatpush.msra.mxu0 %v1209
    %v1211 = vand.u32 %v289, 4294901760
    %1212 = vmatpush.msra.mxu0 %v1211
    %v1213 = vand.u32 %v288, 4294901760
    %1214 = vmatpush.msra.mxu0 %v1213
    %v1215 = vsub.f32 %v254, %v254
    %v1216 = vand.u32 %v1215, 4294901760
    %1217 = vmatmul.f32.gmra.mxu0 %v1216
    %v1218 = vpop.f32.mrf.mxu0
    %v1219 = vadd.f32 %v1181, %v1218
    %1220 = vdwg.mxu0
    %v1221 = vand.u32 %v303, 4294901760
    %v1222 = vsub.f32 %v303, %v1221
    %v1223 = vand.u32 %v1222, 4294901760
    %1224 = vmatpush.msra.mxu0 %v1223
    %v1225 = vand.u32 %v302, 4294901760
    %v1226 = vsub.f32 %v302, %v1225
    %v1227 = vand.u32 %v1226, 4294901760
    %1228 = vmatpush.msra.mxu0 %v1227
    %v1229 = vand.u32 %v301, 4294901760
    %v1230 = vsub.f32 %v301, %v1229
    %v1231 = vand.u32 %v1230, 4294901760
    %1232 = vmatpush.msra.mxu0 %v1231
    %v1233 = vand.u32 %v300, 4294901760
    %v1234 = vsub.f32 %v300, %v1233
    %v1235 = vand.u32 %v1234, 4294901760
    %1236 = vmatpush.msra.mxu0 %v1235
    %v1237 = vand.u32 %v299, 4294901760
    %v1238 = vsub.f32 %v299, %v1237
    %v1239 = vand.u32 %v1238, 4294901760
    %1240 = vmatpush.msra.mxu0 %v1239
    %v1241 = vand.u32 %v298, 4294901760
    %v1242 = vsub.f32 %v298, %v1241
    %v1243 = vand.u32 %v1242, 4294901760
    %1244 = vmatpush.msra.mxu0 %v1243
    %v1245 = vand.u32 %v297, 4294901760
    %v1246 = vsub.f32 %v297, %v1245
    %v1247 = vand.u32 %v1246, 4294901760
    %1248 = vmatpush.msra.mxu0 %v1247
    %v1249 = vand.u32 %v296, 4294901760
    %v1250 = vsub.f32 %v296, %v1249
    %v1251 = vand.u32 %v1250, 4294901760
    %1252 = vmatpush.msra.mxu0 %v1251
    %v1253 = vand.u32 %v295, 4294901760
    %v1254 = vsub.f32 %v295, %v1253
    %v1255 = vand.u32 %v1254, 4294901760
    %1256 = vmatpush.msra.mxu0 %v1255
    %v1257 = vand.u32 %v294, 4294901760
    %v1258 = vsub.f32 %v294, %v1257
    %v1259 = vand.u32 %v1258, 4294901760
    %1260 = vmatpush.msra.mxu0 %v1259
    %v1261 = vand.u32 %v293, 4294901760
    %v1262 = vsub.f32 %v293, %v1261
    %v1263 = vand.u32 %v1262, 4294901760
    %1264 = vmatpush.msra.mxu0 %v1263
    %v1265 = vand.u32 %v292, 4294901760
    %v1266 = vsub.f32 %v292, %v1265
    %v1267 = vand.u32 %v1266, 4294901760
    %1268 = vmatpush.msra.mxu0 %v1267
    %v1269 = vand.u32 %v291, 4294901760
    %v1270 = vsub.f32 %v291, %v1269
    %v1271 = vand.u32 %v1270, 4294901760
    %1272 = vmatpush.msra.mxu0 %v1271
    %v1273 = vand.u32 %v290, 4294901760
    %v1274 = vsub.f32 %v290, %v1273
    %v1275 = vand.u32 %v1274, 4294901760
    %1276 = vmatpush.msra.mxu0 %v1275
    %v1277 = vand.u32 %v289, 4294901760
    %v1278 = vsub.f32 %v289, %v1277
    %v1279 = vand.u32 %v1278, 4294901760
    %1280 = vmatpush.msra.mxu0 %v1279
    %v1281 = vand.u32 %v288, 4294901760
    %v1282 = vsub.f32 %v288, %v1281
    %v1283 = vand.u32 %v1282, 4294901760
    %1284 = vmatpush.msra.mxu0 %v1283
    %1285 = vmatmul.f32.gmra.mxu0 %v254
    %v1286 = vpop.f32.mrf.mxu0
    %v1287 = vadd.f32 %v1219, %v1286
    %1288 = vdwg.mxu0
    %v1289 = vand.u32 %v303, 4294901760
    %1290 = vmatpush.msra.mxu0 %v1289
    %v1291 = vand.u32 %v302, 4294901760
    %1292 = vmatpush.msra.mxu0 %v1291
    %v1293 = vand.u32 %v301, 4294901760
    %1294 = vmatpush.msra.mxu0 %v1293
    %v1295 = vand.u32 %v300, 4294901760
    %1296 = vmatpush.msra.mxu0 %v1295
    %v1297 = vand.u32 %v299, 4294901760
    %1298 = vmatpush.msra.mxu0 %v1297
    %v1299 = vand.u32 %v298, 4294901760
    %1300 = vmatpush.msra.mxu0 %v1299
    %v1301 = vand.u32 %v297, 4294901760
    %1302 = vmatpush.msra.mxu0 %v1301
    %v1303 = vand.u32 %v296, 4294901760
    %1304 = vmatpush.msra.mxu0 %v1303
    %v1305 = vand.u32 %v295, 4294901760
    %1306 = vmatpush.msra.mxu0 %v1305
    %v1307 = vand.u32 %v294, 4294901760
    %1308 = vmatpush.msra.mxu0 %v1307
    %v1309 = vand.u32 %v293, 4294901760
    %1310 = vmatpush.msra.mxu0 %v1309
    %v1311 = vand.u32 %v292, 4294901760
    %1312 = vmatpush.msra.mxu0 %v1311
    %v1313 = vand.u32 %v291, 4294901760
    %1314 = vmatpush.msra.mxu0 %v1313
    %v1315 = vand.u32 %v290, 4294901760
    %1316 = vmatpush.msra.mxu0 %v1315
    %v1317 = vand.u32 %v289, 4294901760
    %1318 = vmatpush.msra.mxu0 %v1317
    %v1319 = vand.u32 %v288, 4294901760
    %1320 = vmatpush.msra.mxu0 %v1319
    %1321 = vmatmul.f32.gmra.mxu0 %v254
    %v1322 = vpop.f32.mrf.mxu0
    %v1323 = vadd.f32 %v1287, %v1322
    %1324 = vdwg.mxu0
    %v1325 = vand.u32 %v319, 4294901760
    %1326 = vmatpush.msra.mxu0 %v1325
    %v1327 = vand.u32 %v318, 4294901760
    %1328 = vmatpush.msra.mxu0 %v1327
    %v1329 = vand.u32 %v317, 4294901760
    %1330 = vmatpush.msra.mxu0 %v1329
    %v1331 = vand.u32 %v316, 4294901760
    %1332 = vmatpush.msra.mxu0 %v1331
    %v1333 = vand.u32 %v315, 4294901760
    %1334 = vmatpush.msra.mxu0 %v1333
    %v1335 = vand.u32 %v314, 4294901760
    %1336 = vmatpush.msra.mxu0 %v1335
    %v1337 = vand.u32 %v313, 4294901760
    %1338 = vmatpush.msra.mxu0 %v1337
    %v1339 = vand.u32 %v312, 4294901760
    %1340 = vmatpush.msra.mxu0 %v1339
    %v1341 = vand.u32 %v311, 4294901760
    %1342 = vmatpush.msra.mxu0 %v1341
    %v1343 = vand.u32 %v310, 4294901760
    %1344 = vmatpush.msra.mxu0 %v1343
    %v1345 = vand.u32 %v309, 4294901760
    %1346 = vmatpush.msra.mxu0 %v1345
    %v1347 = vand.u32 %v308, 4294901760
    %1348 = vmatpush.msra.mxu0 %v1347
    %v1349 = vand.u32 %v307, 4294901760
    %1350 = vmatpush.msra.mxu0 %v1349
    %v1351 = vand.u32 %v306, 4294901760
    %1352 = vmatpush.msra.mxu0 %v1351
    %v1353 = vand.u32 %v305, 4294901760
    %1354 = vmatpush.msra.mxu0 %v1353
    %v1355 = vand.u32 %v304, 4294901760
    %1356 = vmatpush.msra.mxu0 %v1355
    %v1357 = vsub.f32 %v255, %v255
    %v1358 = vand.u32 %v1357, 4294901760
    %v1359 = vsub.f32 %v1357, %v1358
    %v1360 = vand.u32 %v1359, 4294901760
    %1361 = vmatmul.f32.gmra.mxu0 %v1360
    %v1362 = vpop.f32.mrf.mxu0
    %v1363 = vadd.f32 %v1323, %v1362
    %1364 = vdwg.mxu0
    %v1365 = vand.u32 %v319, 4294901760
    %v1366 = vsub.f32 %v319, %v1365
    %v1367 = vand.u32 %v1366, 4294901760
    %v1368 = vsub.f32 %v1366, %v1367
    %v1369 = vand.u32 %v1368, 4294901760
    %1370 = vmatpush.msra.mxu0 %v1369
    %v1371 = vand.u32 %v318, 4294901760
    %v1372 = vsub.f32 %v318, %v1371
    %v1373 = vand.u32 %v1372, 4294901760
    %v1374 = vsub.f32 %v1372, %v1373
    %v1375 = vand.u32 %v1374, 4294901760
    %1376 = vmatpush.msra.mxu0 %v1375
    %v1377 = vand.u32 %v317, 4294901760
    %v1378 = vsub.f32 %v317, %v1377
    %v1379 = vand.u32 %v1378, 4294901760
    %v1380 = vsub.f32 %v1378, %v1379
    %v1381 = vand.u32 %v1380, 4294901760
    %1382 = vmatpush.msra.mxu0 %v1381
    %v1383 = vand.u32 %v316, 4294901760
    %v1384 = vsub.f32 %v316, %v1383
    %v1385 = vand.u32 %v1384, 4294901760
    %v1386 = vsub.f32 %v1384, %v1385
    %v1387 = vand.u32 %v1386, 4294901760
    %1388 = vmatpush.msra.mxu0 %v1387
    %v1389 = vand.u32 %v315, 4294901760
    %v1390 = vsub.f32 %v315, %v1389
    %v1391 = vand.u32 %v1390, 4294901760
    %v1392 = vsub.f32 %v1390, %v1391
    %v1393 = vand.u32 %v1392, 4294901760
    %1394 = vmatpush.msra.mxu0 %v1393
    %v1395 = vand.u32 %v314, 4294901760
    %v1396 = vsub.f32 %v314, %v1395
    %v1397 = vand.u32 %v1396, 4294901760
    %v1398 = vsub.f32 %v1396, %v1397
    %v1399 = vand.u32 %v1398, 4294901760
    %1400 = vmatpush.msra.mxu0 %v1399
    %v1401 = vand.u32 %v313, 4294901760
    %v1402 = vsub.f32 %v313, %v1401
    %v1403 = vand.u32 %v1402, 4294901760
    %v1404 = vsub.f32 %v1402, %v1403
    %v1405 = vand.u32 %v1404, 4294901760
    %1406 = vmatpush.msra.mxu0 %v1405
    %v1407 = vand.u32 %v312, 4294901760
    %v1408 = vsub.f32 %v312, %v1407
    %v1409 = vand.u32 %v1408, 4294901760
    %v1410 = vsub.f32 %v1408, %v1409
    %v1411 = vand.u32 %v1410, 4294901760
    %1412 = vmatpush.msra.mxu0 %v1411
    %v1413 = vand.u32 %v311, 4294901760
    %v1414 = vsub.f32 %v311, %v1413
    %v1415 = vand.u32 %v1414, 4294901760
    %v1416 = vsub.f32 %v1414, %v1415
    %v1417 = vand.u32 %v1416, 4294901760
    %1418 = vmatpush.msra.mxu0 %v1417
    %v1419 = vand.u32 %v310, 4294901760
    %v1420 = vsub.f32 %v310, %v1419
    %v1421 = vand.u32 %v1420, 4294901760
    %v1422 = vsub.f32 %v1420, %v1421
    %v1423 = vand.u32 %v1422, 4294901760
    %1424 = vmatpush.msra.mxu0 %v1423
    %v1425 = vand.u32 %v309, 4294901760
    %v1426 = vsub.f32 %v309, %v1425
    %v1427 = vand.u32 %v1426, 4294901760
    %v1428 = vsub.f32 %v1426, %v1427
    %v1429 = vand.u32 %v1428, 4294901760
    %1430 = vmatpush.msra.mxu0 %v1429
    %v1431 = vand.u32 %v308, 4294901760
    %v1432 = vsub.f32 %v308, %v1431
    %v1433 = vand.u32 %v1432, 4294901760
    %v1434 = vsub.f32 %v1432, %v1433
    %v1435 = vand.u32 %v1434, 4294901760
    %1436 = vmatpush.msra.mxu0 %v1435
    %v1437 = vand.u32 %v307, 4294901760
    %v1438 = vsub.f32 %v307, %v1437
    %v1439 = vand.u32 %v1438, 4294901760
    %v1440 = vsub.f32 %v1438, %v1439
    %v1441 = vand.u32 %v1440, 4294901760
    %1442 = vmatpush.msra.mxu0 %v1441
    %v1443 = vand.u32 %v306, 4294901760
    %v1444 = vsub.f32 %v306, %v1443
    %v1445 = vand.u32 %v1444, 4294901760
    %v1446 = vsub.f32 %v1444, %v1445
    %v1447 = vand.u32 %v1446, 4294901760
    %1448 = vmatpush.msra.mxu0 %v1447
    %v1449 = vand.u32 %v305, 4294901760
    %v1450 = vsub.f32 %v305, %v1449
    %v1451 = vand.u32 %v1450, 4294901760
    %v1452 = vsub.f32 %v1450, %v1451
    %v1453 = vand.u32 %v1452, 4294901760
    %1454 = vmatpush.msra.mxu0 %v1453
    %v1455 = vand.u32 %v304, 4294901760
    %v1456 = vsub.f32 %v304, %v1455
    %v1457 = vand.u32 %v1456, 4294901760
    %v1458 = vsub.f32 %v1456, %v1457
    %v1459 = vand.u32 %v1458, 4294901760
    %1460 = vmatpush.msra.mxu0 %v1459
    %1461 = vmatmul.f32.gmra.mxu0 %v255
    %v1462 = vpop.f32.mrf.mxu0
    %v1463 = vadd.f32 %v1363, %v1462
    %1464 = vdwg.mxu0
    %v1465 = vand.u32 %v319, 4294901760
    %v1466 = vsub.f32 %v319, %v1465
    %1467 = vmatpush.msra.mxu0 %v1466
    %v1468 = vand.u32 %v318, 4294901760
    %v1469 = vsub.f32 %v318, %v1468
    %1470 = vmatpush.msra.mxu0 %v1469
    %v1471 = vand.u32 %v317, 4294901760
    %v1472 = vsub.f32 %v317, %v1471
    %1473 = vmatpush.msra.mxu0 %v1472
    %v1474 = vand.u32 %v316, 4294901760
    %v1475 = vsub.f32 %v316, %v1474
    %1476 = vmatpush.msra.mxu0 %v1475
    %v1477 = vand.u32 %v315, 4294901760
    %v1478 = vsub.f32 %v315, %v1477
    %1479 = vmatpush.msra.mxu0 %v1478
    %v1480 = vand.u32 %v314, 4294901760
    %v1481 = vsub.f32 %v314, %v1480
    %1482 = vmatpush.msra.mxu0 %v1481
    %v1483 = vand.u32 %v313, 4294901760
    %v1484 = vsub.f32 %v313, %v1483
    %1485 = vmatpush.msra.mxu0 %v1484
    %v1486 = vand.u32 %v312, 4294901760
    %v1487 = vsub.f32 %v312, %v1486
    %1488 = vmatpush.msra.mxu0 %v1487
    %v1489 = vand.u32 %v311, 4294901760
    %v1490 = vsub.f32 %v311, %v1489
    %1491 = vmatpush.msra.mxu0 %v1490
    %v1492 = vand.u32 %v310, 4294901760
    %v1493 = vsub.f32 %v310, %v1492
    %1494 = vmatpush.msra.mxu0 %v1493
    %v1495 = vand.u32 %v309, 4294901760
    %v1496 = vsub.f32 %v309, %v1495
    %1497 = vmatpush.msra.mxu0 %v1496
    %v1498 = vand.u32 %v308, 4294901760
    %v1499 = vsub.f32 %v308, %v1498
    %1500 = vmatpush.msra.mxu0 %v1499
    %v1501 = vand.u32 %v307, 4294901760
    %v1502 = vsub.f32 %v307, %v1501
    %1503 = vmatpush.msra.mxu0 %v1502
    %v1504 = vand.u32 %v306, 4294901760
    %v1505 = vsub.f32 %v306, %v1504
    %1506 = vmatpush.msra.mxu0 %v1505
    %v1507 = vand.u32 %v305, 4294901760
    %v1508 = vsub.f32 %v305, %v1507
    %1509 = vmatpush.msra.mxu0 %v1508
    %v1510 = vand.u32 %v304, 4294901760
    %v1511 = vsub.f32 %v304, %v1510
    %1512 = vmatpush.msra.mxu0 %v1511
    %v1513 = vsub.f32 %v255, %v255
    %1514 = vmatmul.f32.gmra.mxu0 %v1513
    %v1515 = vpop.f32.mrf.mxu0
    %v1516 = vadd.f32 %v1463, %v1515
    %1517 = vdwg.mxu0
    %v1518 = vand.u32 %v319, 4294901760
    %1519 = vmatpush.msra.mxu0 %v1518
    %v1520 = vand.u32 %v318, 4294901760
    %1521 = vmatpush.msra.mxu0 %v1520
    %v1522 = vand.u32 %v317, 4294901760
    %1523 = vmatpush.msra.mxu0 %v1522
    %v1524 = vand.u32 %v316, 4294901760
    %1525 = vmatpush.msra.mxu0 %v1524
    %v1526 = vand.u32 %v315, 4294901760
    %1527 = vmatpush.msra.mxu0 %v1526
    %v1528 = vand.u32 %v314, 4294901760
    %1529 = vmatpush.msra.mxu0 %v1528
    %v1530 = vand.u32 %v313, 4294901760
    %1531 = vmatpush.msra.mxu0 %v1530
    %v1532 = vand.u32 %v312, 4294901760
    %1533 = vmatpush.msra.mxu0 %v1532
    %v1534 = vand.u32 %v311, 4294901760
    %1535 = vmatpush.msra.mxu0 %v1534
    %v1536 = vand.u32 %v310, 4294901760
    %1537 = vmatpush.msra.mxu0 %v1536
    %v1538 = vand.u32 %v309, 4294901760
    %1539 = vmatpush.msra.mxu0 %v1538
    %v1540 = vand.u32 %v308, 4294901760
    %1541 = vmatpush.msra.mxu0 %v1540
    %v1542 = vand.u32 %v307, 4294901760
    %1543 = vmatpush.msra.mxu0 %v1542
    %v1544 = vand.u32 %v306, 4294901760
    %1545 = vmatpush.msra.mxu0 %v1544
    %v1546 = vand.u32 %v305, 4294901760
    %1547 = vmatpush.msra.mxu0 %v1546
    %v1548 = vand.u32 %v304, 4294901760
    %1549 = vmatpush.msra.mxu0 %v1548
    %v1550 = vsub.f32 %v255, %v255
    %v1551 = vand.u32 %v1550, 4294901760
    %1552 = vmatmul.f32.gmra.mxu0 %v1551
    %v1553 = vpop.f32.mrf.mxu0
    %v1554 = vadd.f32 %v1516, %v1553
    %1555 = vdwg.mxu0
    %v1556 = vand.u32 %v319, 4294901760
    %v1557 = vsub.f32 %v319, %v1556
    %v1558 = vand.u32 %v1557, 4294901760
    %1559 = vmatpush.msra.mxu0 %v1558
    %v1560 = vand.u32 %v318, 4294901760
    %v1561 = vsub.f32 %v318, %v1560
    %v1562 = vand.u32 %v1561, 4294901760
    %1563 = vmatpush.msra.mxu0 %v1562
    %v1564 = vand.u32 %v317, 4294901760
    %v1565 = vsub.f32 %v317, %v1564
    %v1566 = vand.u32 %v1565, 4294901760
    %1567 = vmatpush.msra.mxu0 %v1566
    %v1568 = vand.u32 %v316, 4294901760
    %v1569 = vsub.f32 %v316, %v1568
    %v1570 = vand.u32 %v1569, 4294901760
    %1571 = vmatpush.msra.mxu0 %v1570
    %v1572 = vand.u32 %v315, 4294901760
    %v1573 = vsub.f32 %v315, %v1572
    %v1574 = vand.u32 %v1573, 4294901760
    %1575 = vmatpush.msra.mxu0 %v1574
    %v1576 = vand.u32 %v314, 4294901760
    %v1577 = vsub.f32 %v314, %v1576
    %v1578 = vand.u32 %v1577, 4294901760
    %1579 = vmatpush.msra.mxu0 %v1578
    %v1580 = vand.u32 %v313, 4294901760
    %v1581 = vsub.f32 %v313, %v1580
    %v1582 = vand.u32 %v1581, 4294901760
    %1583 = vmatpush.msra.mxu0 %v1582
    %v1584 = vand.u32 %v312, 4294901760
    %v1585 = vsub.f32 %v312, %v1584
    %v1586 = vand.u32 %v1585, 4294901760
    %1587 = vmatpush.msra.mxu0 %v1586
    %v1588 = vand.u32 %v311, 4294901760
    %v1589 = vsub.f32 %v311, %v1588
    %v1590 = vand.u32 %v1589, 4294901760
    %1591 = vmatpush.msra.mxu0 %v1590
    %v1592 = vand.u32 %v310, 4294901760
    %v1593 = vsub.f32 %v310, %v1592
    %v1594 = vand.u32 %v1593, 4294901760
    %1595 = vmatpush.msra.mxu0 %v1594
    %v1596 = vand.u32 %v309, 4294901760
    %v1597 = vsub.f32 %v309, %v1596
    %v1598 = vand.u32 %v1597, 4294901760
    %1599 = vmatpush.msra.mxu0 %v1598
    %v1600 = vand.u32 %v308, 4294901760
    %v1601 = vsub.f32 %v308, %v1600
    %v1602 = vand.u32 %v1601, 4294901760
    %1603 = vmatpush.msra.mxu0 %v1602
    %v1604 = vand.u32 %v307, 4294901760
    %v1605 = vsub.f32 %v307, %v1604
    %v1606 = vand.u32 %v1605, 4294901760
    %1607 = vmatpush.msra.mxu0 %v1606
    %v1608 = vand.u32 %v306, 4294901760
    %v1609 = vsub.f32 %v306, %v1608
    %v1610 = vand.u32 %v1609, 4294901760
    %1611 = vmatpush.msra.mxu0 %v1610
    %v1612 = vand.u32 %v305, 4294901760
    %v1613 = vsub.f32 %v305, %v1612
    %v1614 = vand.u32 %v1613, 4294901760
    %1615 = vmatpush.msra.mxu0 %v1614
    %v1616 = vand.u32 %v304, 4294901760
    %v1617 = vsub.f32 %v304, %v1616
    %v1618 = vand.u32 %v1617, 4294901760
    %1619 = vmatpush.msra.mxu0 %v1618
    %1620 = vmatmul.f32.gmra.mxu0 %v255
    %v1621 = vpop.f32.mrf.mxu0
    %v1622 = vadd.f32 %v1554, %v1621
    %1623 = vdwg.mxu0
    %v1624 = vand.u32 %v319, 4294901760
    %1625 = vmatpush.msra.mxu0 %v1624
    %v1626 = vand.u32 %v318, 4294901760
    %1627 = vmatpush.msra.mxu0 %v1626
    %v1628 = vand.u32 %v317, 4294901760
    %1629 = vmatpush.msra.mxu0 %v1628
    %v1630 = vand.u32 %v316, 4294901760
    %1631 = vmatpush.msra.mxu0 %v1630
    %v1632 = vand.u32 %v315, 4294901760
    %1633 = vmatpush.msra.mxu0 %v1632
    %v1634 = vand.u32 %v314, 4294901760
    %1635 = vmatpush.msra.mxu0 %v1634
    %v1636 = vand.u32 %v313, 4294901760
    %1637 = vmatpush.msra.mxu0 %v1636
    %v1638 = vand.u32 %v312, 4294901760
    %1639 = vmatpush.msra.mxu0 %v1638
    %v1640 = vand.u32 %v311, 4294901760
    %1641 = vmatpush.msra.mxu0 %v1640
    %v1642 = vand.u32 %v310, 4294901760
    %1643 = vmatpush.msra.mxu0 %v1642
    %v1644 = vand.u32 %v309, 4294901760
    %1645 = vmatpush.msra.mxu0 %v1644
    %v1646 = vand.u32 %v308, 4294901760
    %1647 = vmatpush.msra.mxu0 %v1646
    %v1648 = vand.u32 %v307, 4294901760
    %1649 = vmatpush.msra.mxu0 %v1648
    %v1650 = vand.u32 %v306, 4294901760
    %1651 = vmatpush.msra.mxu0 %v1650
    %v1652 = vand.u32 %v305, 4294901760
    %1653 = vmatpush.msra.mxu0 %v1652
    %v1654 = vand.u32 %v304, 4294901760
    %1655 = vmatpush.msra.mxu0 %v1654
    %1656 = vmatmul.f32.gmra.mxu0 %v255
    %v1657 = vpop.f32.mrf.mxu0
    %v1658 = vadd.f32 %v1622, %v1657
    %1659 = vdwg.mxu0
    %1660 = vst [vmem:[#allocation8] sm:$0xff] %v1658
    // Predicated region
    $region26: #{tpu_custom_call.1} parent=1 // pred_check
      _
    $region27: #{tpu_custom_call.1} parent=1 // pred_check_branch
      %1662 = sbr.rel (0) target = $region29
    $region28: #{tpu_custom_call.1} parent=1 // pred_region
      %1664 = vsyncadd [#allocation4], 0
      %s1666 = sshll.u32 [#allocation8], 4
      %s1667 = int_to_ptr.vmem [resolvable:$true] %s1666
      %s1668 = sshll.u32 %s3, 4
      %s1669 = int_to_ptr.hbm [resolvable:$true] %s1668
      %1671 = dma.vmem_to_hbm [thread:$0]  %s1667, 128, %s1669, [#allocation4]
    $region29: #{tpu_custom_call.1} parent=1 // pred_fallthru
      _
    // Predicated region
    $region30: #{tpu_custom_call.1} parent=1 // pred_check
      _
    $region31: #{tpu_custom_call.1} parent=1 // pred_check_branch
      %1673 = sbr.rel (0) target = $region33
    $region32: #{tpu_custom_call.1} parent=1 // pred_region
      %1675 = dma.done [#allocation4], 128
    $region33: #{tpu_custom_call.1} parent=1 // pred_fallthru
      _
    %1676 = vsyncpa [#allocation3], 1
    %1677 = vsyncpa [#allocation6], 1
    %1678 = vsyncpa [#allocation4], 1

</llo_original>
